<compile_context>
chip_gen: v7x
topology: tpu7x:2x2x1
jax: 0.10.0
libtpu: 0.0.40
codegen_flags: <defaults>
</compile_context>

<pallas_src>
import functools

import jax
import jax.numpy as jnp
import numpy as np
from jax.experimental import pallas as pl
from jax.experimental.pallas import tpu as pltpu

_NEG_INF = -1e30
_LANES = 128


def _debias_supcon_kernel(
    fr_ref, fc_ref, lr_ref, lc_ref, br_ref, bc_ref,   # inputs
    out_ref,                                          # output (lane-dense)
    m_ref, l_ref, spos_ref, npos_ref,                 # VMEM scratch accumulators
    *, n_valid, has_pad):
    i = pl.program_id(0)          # anchor-row tile
    k = pl.program_id(1)          # contrast-column tile (reduction axis)
    nk = pl.num_programs(1)
    tm = fr_ref.shape[0]
    tk = fc_ref.shape[0]

    @pl.when(k == 0)
    def _init():
        m_ref[...] = jnp.full(m_ref.shape, _NEG_INF, m_ref.dtype)
        l_ref[...] = jnp.zeros(l_ref.shape, l_ref.dtype)
        spos_ref[...] = jnp.zeros(spos_ref.shape, spos_ref.dtype)
        npos_ref[...] = jnp.zeros(npos_ref.shape, npos_ref.dtype)

    # Raw logits for this (tm, tk) tile.  1/temperature is already folded into
    # the row operand in the wrapper and both operands arrive pre-cast to the
    # matmul dtype (bf16 by default), so there is no per-step scale/cast work.
    s = jax.lax.dot_general(fr_ref[...], fc_ref[...], (((1,), (1,)), ((), ())),
                            preferred_element_type=jnp.float32)   # [tm, tk]

    # Positive-pair mask without the structural parts: same label AND
    # different bias.  Structural terms (self-contrast diagonal, padded
    # columns) only exist on boundary tiles and are applied only there.
    pos_base = (lr_ref[...] == lc_ref[...]) & (br_ref[...] != bc_ref[...])

    # Scalar tile classification: a tile needs the expensive masks only if it
    # intersects the diagonal or (when N was padded) is the last column tile.
    diag_in_tile = (i * tm < (k + 1) * tk) & (k * tk < (i + 1) * tm)
    if has_pad:
        needs_mask = diag_in_tile | (k == nk - 1)
    else:
        needs_mask = diag_in_tile

    m_prev = m_ref[...]

    @pl.when(needs_mask)
    def _edge_tile():
        row_ids = i * tm + jax.lax.broadcasted_iota(jnp.int32, (tm, tk), 0)
        col_ids = k * tk + jax.lax.broadcasted_iota(jnp.int32, (tm, tk), 1)
        valid = col_ids < n_valid                 # drop padded columns
        keep = valid & (row_ids != col_ids)       # also drop self-contrast
        pos = pos_base & keep

        # Online (flash-style) softmax statistics: row max includes the
        # diagonal (as in the reference), the denominator excludes it.
        m_new = jnp.maximum(
            m_prev,
            jnp.max(jnp.where(valid, s, _NEG_INF), axis=1, keepdims=True))
        alpha = jnp.exp(m_prev - m_new)
        p = jnp.where(keep, jnp.exp(s - m_new), 0.0)
        l_ref[...] = alpha * l_ref[...] + jnp.sum(p, axis=1, keepdims=True)
        m_ref[...] = m_new
        spos_ref[...] += jnp.sum(jnp.where(pos, s, 0.0), axis=1, keepdims=True)
        npos_ref[...] += jnp.sum(pos.astype(jnp.float32), axis=1, keepdims=True)

    @pl.when(jnp.logical_not(needs_mask))
    def _interior_tile():
        # Fast path: no diagonal entries and no padded columns in this tile,
        # so no iotas, no validity compares and no masked selects are needed.
        m_new = jnp.maximum(m_prev, jnp.max(s, axis=1, keepdims=True))
        alpha = jnp.exp(m_prev - m_new)
        p = jnp.exp(s - m_new)
        l_ref[...] = alpha * l_ref[...] + jnp.sum(p, axis=1, keepdims=True)
        m_ref[...] = m_new
        spos_ref[...] += jnp.sum(jnp.where(pos_base, s, 0.0), axis=1,
                                 keepdims=True)
        npos_ref[...] += jnp.sum(pos_base.astype(jnp.float32), axis=1,
                                 keepdims=True)

    @pl.when(k == nk - 1)
    def _finalize():
        # Positive-pair accumulators hold *raw* logits; the row-max shift and
        # the log-denominator are applied once here (they cancel in the masked
        # mean: mean_pos(logits - log denom) = sum_pos(raw)/n - m - log l).
        n_pos = npos_ref[...]
        has_pos = n_pos > 0.0
        mean_lp = (spos_ref[...] / jnp.where(has_pos, n_pos, 1.0)
                   - m_ref[...] - jnp.log(l_ref[...] + 1e-9))
        loss = jnp.where(has_pos, -mean_lp, 0.0)               # [tm, 1]
        # Lane-dense store (unmasked vst); the wrapper reads lane 0.
        out_ref[...] = jnp.broadcast_to(loss, (tm, _LANES))


def _pick_tile(n_pad, cap):
    t = min(cap, n_pad)
    while n_pad % t:
        t -= _LANES
    return t


def debias_supcon_loss(features, labels, biases, *, temperature=0.07,
                       base_temperature=0.07, contrast_mode="all",
                       matmul_dtype=jnp.bfloat16, tm_cap=512, tk_cap=512):
    """features: [B, V, D] float; labels, biases: [B] int. Returns [V, B]."""
    if contrast_mode != "all":
        # TODO(synk): contrast_mode='one' (single anchor view) not implemented.
        raise NotImplementedError("only contrast_mode='all' is supported")
    del base_temperature  # the reference forward never uses it (no rescaling)

    B, V, D = features.shape
    N = V * B
    n_pad = pl.cdiv(N, _LANES) * _LANES
    tm = _pick_tile(n_pad, tm_cap)
    tk = _pick_tile(n_pad, tk_cap)
    # v7x has 2 TensorCores; ensure the "parallel" row-tile axis has >= 2
    # tiles so megacore sharding has something to split.
    if n_pad // tm < 2:
        tm = n_pad // 2

    inv_temp = 1.0 / temperature

    # contrast_feature == torch.cat(torch.unbind(features, 1), 0): view-major.
    cf = jnp.transpose(features, (1, 0, 2)).reshape(N, D)
    # Fold 1/temperature into the ROW operand only and pre-cast both operands
    # to the matmul dtype once in the wrapper (instead of per grid step on the
    # re-streamed tiles).  NOTE: rows and cols must stay distinct arrays
    # (scaled vs unscaled) or 1/T would be applied twice.
    cf_rows = (cf.astype(jnp.float32) * inv_temp).astype(matmul_dtype)
    cf_cols = cf.astype(matmul_dtype)
    lab = jnp.tile(jnp.reshape(labels, (-1,)).astype(jnp.int32), V)
    bia = jnp.tile(jnp.reshape(biases, (-1,)).astype(jnp.int32), V)
    if n_pad != N:
        pad = n_pad - N
        cf_rows = jnp.pad(cf_rows, ((0, pad), (0, 0)))
        cf_cols = jnp.pad(cf_cols, ((0, pad), (0, 0)))
        lab = jnp.pad(lab, (0, pad), constant_values=-1)
        bia = jnp.pad(bia, (0, pad), constant_values=-1)

    # Row-layout (tm,1) + lane-layout (1,tk) views of the tiny label/bias
    # vectors (<=2 KB per tile DMA) -- avoids any in-kernel relayout.
    lab_r = lab.reshape(n_pad, 1)
    lab_c = lab.reshape(1, n_pad)
    bia_r = bia.reshape(n_pad, 1)
    bia_c = bia.reshape(1, n_pad)

    kernel = functools.partial(
        _debias_supcon_kernel, n_valid=N, has_pad=(n_pad != N))

    # Size the scoped-VMEM limit from the actual tiles (important on v7x where
    # physical VMEM is only 64 MiB) instead of a blanket constant.
    itemsize = np.dtype(matmul_dtype).itemsize
    vmem_bytes = (
        2 * tm * D * itemsize            # row feature tiles (double-buffered)
        + 2 * tk * D * itemsize          # col feature tiles (double-buffered)
        + 2 * tm * _LANES * 4            # output block (double-buffered)
        + 4 * (tm + tk) * 4              # label / bias tiles
        + 4 * tm * 4                     # accumulator scratch
        + 8 * tm * tk * 4)               # f32 elementwise temporaries (generous)
    vmem_limit = int(min(max(vmem_bytes + (4 << 20), 24 << 20), 64 << 20))

    grid = (n_pad // tm, n_pad // tk)
    out = pl.pallas_call(
        kernel,
        out_shape=jax.ShapeDtypeStruct((n_pad, _LANES), jnp.float32),
        grid_spec=pltpu.PrefetchScalarGridSpec(
            num_scalar_prefetch=0,
            grid=grid,
            in_specs=[
                pl.BlockSpec((tm, D), lambda i, k: (i, 0)),    # anchor rows
                # If a profile shows exposed DMA at row-tile boundaries, add
                # pipeline_mode=pl.Buffered(3) to the spec below (tiny tiles).
                pl.BlockSpec((tk, D), lambda i, k: (k, 0)),    # contrast cols
                pl.BlockSpec((tm, 1), lambda i, k: (i, 0)),    # labels (rows)
                pl.BlockSpec((1, tk), lambda i, k: (0, k)),    # labels (cols)
                pl.BlockSpec((tm, 1), lambda i, k: (i, 0)),    # biases (rows)
                pl.BlockSpec((1, tk), lambda i, k: (0, k)),    # biases (cols)
            ],
            out_specs=pl.BlockSpec((tm, _LANES), lambda i, k: (i, 0)),
            scratch_shapes=[pltpu.VMEM((tm, 1), jnp.float32) for _ in range(4)],
        ),
        compiler_params=pltpu.CompilerParams(
            dimension_semantics=("parallel", "arbitrary"),
            vmem_limit_bytes=vmem_limit),
    )(cf_rows, cf_cols, lab_r, lab_c, bia_r, bia_c)

    # loss.view(anchor_count, batch_size)
    return out[:N, 0].reshape(V, B)


def _reference(features, labels, biases, temperature=0.07):
    """Pure-JAX reference mirroring the PyTorch forward."""
    B, V, D = features.shape
    N = V * B
    cf = jnp.transpose(features, (1, 0, 2)).reshape(N, D).astype(jnp.float32)
    adc = (cf @ cf.T) / temperature
    logits = adc - jnp.max(adc, axis=1, keepdims=True)
    lab = labels.reshape(-1, 1)
    bia = biases.reshape(-1, 1)
    mask = ((lab == lab.T) & (bia != bia.T)).astype(jnp.float32)
    mask = jnp.tile(mask, (V, V))
    logits_mask = 1.0 - jnp.eye(N, dtype=jnp.float32)
    mask = mask * logits_mask
    exp_logits = jnp.exp(logits) * logits_mask
    log_prob = logits - jnp.log(jnp.sum(exp_logits, axis=1, keepdims=True) + 1e-9)
    sum_mask = jnp.sum(mask, axis=1)
    sum_mask = jnp.where(sum_mask == 0, 1.0, sum_mask)
    mean_log_prob_pos = jnp.sum(mask * log_prob, axis=1) / sum_mask
    return (-mean_log_prob_pos).reshape(V, B)


if __name__ == "__main__":
    key = jax.random.PRNGKey(0)
    (k_feat, k_lab, k_bias, k_feat2, k_lab2, k_bias2,
     k_feat3, k_lab3, k_bias3) = jax.random.split(key, 9)

    # Primary small config: B=8 samples, V=2 views, D=32 (N=16, padded to 128).
    B, V, D = 8, 2, 32
    feats = jax.random.normal(k_feat, (B, V, D), dtype=jnp.float32)
    feats = feats / jnp.linalg.norm(feats, axis=-1, keepdims=True)
    # bf16-representable features + a power-of-two temperature so the f32
    # reference and the bf16 MXU path agree to f32-accumulation precision.
    feats = feats.astype(jnp.bfloat16).astype(jnp.float32)
    labels = jax.random.randint(k_lab, (B,), 0, 3, dtype=jnp.int32)
    biases = jax.random.randint(k_bias, (B,), 0, 2, dtype=jnp.int32)

    t_exact = 0.0625
    ref = _reference(feats, labels, biases, temperature=t_exact)

    out_bf16 = jax.block_until_ready(
        debias_supcon_loss(feats, labels, biases, temperature=t_exact))
    assert out_bf16.shape == (V, B)
    np.testing.assert_allclose(np.asarray(out_bf16), np.asarray(ref),
                               atol=3e-4, rtol=3e-4)

    out_f32 = jax.block_until_ready(
        debias_supcon_loss(feats, labels, biases, temperature=t_exact,
                           matmul_dtype=jnp.float32))
    np.testing.assert_allclose(np.asarray(out_f32), np.asarray(ref),
                               atol=3e-4, rtol=3e-4)

    # Module-default temperature: bf16 MXU path vs the f32 reference.
    ref07 = _reference(feats, labels, biases, temperature=0.07)
    out07 = jax.block_until_ready(
        debias_supcon_loss(feats, labels, biases, temperature=0.07))
    np.testing.assert_allclose(np.asarray(out07), np.asarray(ref07),
                               atol=5e-2, rtol=5e-2)

    # Multi-tile / padded path: N = 144 -> padded to 256, a 2x2 grid of
    # (128, 128) tiles exercising the streaming-softmax accumulators, the
    # edge-tile mask path (diag + pad) AND the interior fast path (tile (1,0)).
    B2, V2, D2 = 72, 2, 32
    feats2 = jax.random.normal(k_feat2, (B2, V2, D2), dtype=jnp.float32)
    feats2 = feats2 / jnp.linalg.norm(feats2, axis=-1, keepdims=True)
    feats2 = feats2.astype(jnp.bfloat16).astype(jnp.float32)
    labels2 = jax.random.randint(k_lab2, (B2,), 0, 5, dtype=jnp.int32)
    biases2 = jax.random.randint(k_bias2, (B2,), 0, 2, dtype=jnp.int32)
    ref2 = _reference(feats2, labels2, biases2, temperature=t_exact)
    out2 = jax.block_until_ready(
        debias_supcon_loss(feats2, labels2, biases2, temperature=t_exact,
                           tm_cap=128, tk_cap=128))
    np.testing.assert_allclose(np.asarray(out2), np.asarray(ref2),
                               atol=3e-4, rtol=3e-4)

    # No-padding path (N = 256 exactly): exercises the static has_pad=False
    # specialization plus interior fast-path tiles (0,1) and (1,0).
    B3, V3, D3 = 128, 2, 64
    feats3 = jax.random.normal(k_feat3, (B3, V3, D3), dtype=jnp.float32)
    feats3 = feats3 / jnp.linalg.norm(feats3, axis=-1, keepdims=True)
    feats3 = feats3.astype(jnp.bfloat16).astype(jnp.float32)
    labels3 = jax.random.randint(k_lab3, (B3,), 0, 7, dtype=jnp.int32)
    biases3 = jax.random.randint(k_bias3, (B3,), 0, 2, dtype=jnp.int32)
    ref3 = _reference(feats3, labels3, biases3, temperature=t_exact)
    out3 = jax.block_until_ready(
        debias_supcon_loss(feats3, labels3, biases3, temperature=t_exact,
                           tk_cap=128))
    np.testing.assert_allclose(np.asarray(out3), np.asarray(ref3),
                               atol=3e-4, rtol=3e-4)

    print("KERNEL_OK")
</pallas_src>

<mosaic_0001>
module attributes {stable_mosaic.version = 11 : i64} {
  func.func @_debias_supcon_kernel(%arg0: i32, %arg1: i32, %arg2: memref<64x32xbf16, #tpu.memory_space<vmem>>, %arg3: memref<128x32xbf16, #tpu.memory_space<vmem>>, %arg4: memref<64x1xi32, #tpu.memory_space<vmem>>, %arg5: memref<1x128xi32, #tpu.memory_space<vmem>>, %arg6: memref<64x1xi32, #tpu.memory_space<vmem>>, %arg7: memref<1x128xi32, #tpu.memory_space<vmem>>, %arg8: memref<64x128xf32, #tpu.memory_space<vmem>>, %arg9: memref<64x1xf32, #tpu.memory_space<vmem>>, %arg10: memref<64x1xf32, #tpu.memory_space<vmem>>, %arg11: memref<64x1xf32, #tpu.memory_space<vmem>>, %arg12: memref<64x1xf32, #tpu.memory_space<vmem>>) attributes {dimension_semantics = [#tpu.dimension_semantics<parallel>, #tpu.dimension_semantics<arbitrary>], iteration_bounds = array<i64: 2, 1>, scalar_prefetch = 0 : i64, scratch_operands = 4 : i64, tpu.core_type = #tpu.core_type<tc>, window_params = [{transform_indices = @transform_0, window_bounds = array<i64: 64, 32>}, {transform_indices = @transform_1, window_bounds = array<i64: 128, 32>}, {transform_indices = @transform_2, window_bounds = array<i64: 64, 1>}, {transform_indices = @transform_3, window_bounds = array<i64: 1, 128>}, {transform_indices = @transform_4, window_bounds = array<i64: 64, 1>}, {transform_indices = @transform_5, window_bounds = array<i64: 1, 128>}, {transform_indices = @transform_6, window_bounds = array<i64: 64, 128>}]} {
    %c0_i32 = arith.constant 0 : i32
    %0 = arith.cmpi eq, %arg1, %c0_i32 : i32
    %1 = arith.extui %0 : i1 to i32
    %c0_i32_0 = arith.constant 0 : i32
    %2 = arith.cmpi ne, %1, %c0_i32_0 : i32
    scf.if %2 {
      %cst_22 = arith.constant -1.000000e+30 : f32
      %37 = vector.broadcast %cst_22 : f32 to vector<64x1xf32>
      %c0_23 = arith.constant 0 : index
      %c0_24 = arith.constant 0 : index
      %38 = vector.load %arg9[%c0_23, %c0_24] : memref<64x1xf32, #tpu.memory_space<vmem>>, vector<64x1xf32>
      tpu.vector_store %arg9[%c0_23, %c0_24], %37 {strides = array<i32>} : memref<64x1xf32, #tpu.memory_space<vmem>>, vector<64x1xf32>,
      %cst_25 = arith.constant 0.000000e+00 : f32
      %39 = vector.broadcast %cst_25 : f32 to vector<64x1xf32>
      %c0_26 = arith.constant 0 : index
      %c0_27 = arith.constant 0 : index
      %40 = vector.load %arg10[%c0_26, %c0_27] : memref<64x1xf32, #tpu.memory_space<vmem>>, vector<64x1xf32>
      tpu.vector_store %arg10[%c0_26, %c0_27], %39 {strides = array<i32>} : memref<64x1xf32, #tpu.memory_space<vmem>>, vector<64x1xf32>,
      %cst_28 = arith.constant 0.000000e+00 : f32
      %41 = vector.broadcast %cst_28 : f32 to vector<64x1xf32>
      %c0_29 = arith.constant 0 : index
      %c0_30 = arith.constant 0 : index
      %42 = vector.load %arg11[%c0_29, %c0_30] : memref<64x1xf32, #tpu.memory_space<vmem>>, vector<64x1xf32>
      tpu.vector_store %arg11[%c0_29, %c0_30], %41 {strides = array<i32>} : memref<64x1xf32, #tpu.memory_space<vmem>>, vector<64x1xf32>,
      %cst_31 = arith.constant 0.000000e+00 : f32
      %43 = vector.broadcast %cst_31 : f32 to vector<64x1xf32>
      %c0_32 = arith.constant 0 : index
      %c0_33 = arith.constant 0 : index
      %44 = vector.load %arg12[%c0_32, %c0_33] : memref<64x1xf32, #tpu.memory_space<vmem>>, vector<64x1xf32>
      tpu.vector_store %arg12[%c0_32, %c0_33], %43 {strides = array<i32>} : memref<64x1xf32, #tpu.memory_space<vmem>>, vector<64x1xf32>,
    } else {
    }
    %c0 = arith.constant 0 : index
    %c0_1 = arith.constant 0 : index
    %3 = vector.load %arg2[%c0, %c0_1] : memref<64x32xbf16, #tpu.memory_space<vmem>>, vector<64x32xbf16>
    %c0_2 = arith.constant 0 : index
    %c0_3 = arith.constant 0 : index
    %4 = vector.load %arg3[%c0_2, %c0_3] : memref<128x32xbf16, #tpu.memory_space<vmem>>, vector<128x32xbf16>
    %cst = arith.constant dense<0.000000e+00> : vector<64x128xf32>
    %5 = tpu.matmul %3, %4, %cst {dimension_numbers = #tpu.dot_dimension_numbers<[1], [1], [0], [0], [0, 0, 1, 0], [], []>} : vector<64x32xbf16>, vector<128x32xbf16>, vector<64x128xf32> -> vector<64x128xf32>
    %c0_4 = arith.constant 0 : index
    %c0_5 = arith.constant 0 : index
    %6 = vector.load %arg4[%c0_4, %c0_5] : memref<64x1xi32, #tpu.memory_space<vmem>>, vector<64x1xi32>
    %c0_6 = arith.constant 0 : index
    %c0_7 = arith.constant 0 : index
    %7 = vector.load %arg5[%c0_6, %c0_7] : memref<1x128xi32, #tpu.memory_space<vmem>>, vector<1x128xi32>
    %8 = vector.broadcast %6 : vector<64x1xi32> to vector<64x128xi32>
    %9 = vector.broadcast %7 : vector<1x128xi32> to vector<64x128xi32>
    %10 = arith.cmpi eq, %8, %9 : vector<64x128xi32>
    %c0_8 = arith.constant 0 : index
    %c0_9 = arith.constant 0 : index
    %11 = vector.load %arg6[%c0_8, %c0_9] : memref<64x1xi32, #tpu.memory_space<vmem>>, vector<64x1xi32>
    %c0_10 = arith.constant 0 : index
    %c0_11 = arith.constant 0 : index
    %12 = vector.load %arg7[%c0_10, %c0_11] : memref<1x128xi32, #tpu.memory_space<vmem>>, vector<1x128xi32>
    %13 = vector.broadcast %11 : vector<64x1xi32> to vector<64x128xi32>
    %14 = vector.broadcast %12 : vector<1x128xi32> to vector<64x128xi32>
    %15 = arith.cmpi ne, %13, %14 : vector<64x128xi32>
    %16 = arith.andi %10, %15 : vector<64x128xi1>
    %c64_i32 = arith.constant 64 : i32
    %17 = arith.muli %arg0, %c64_i32 : i32
    %c1_i32 = arith.constant 1 : i32
    %18 = arith.addi %arg1, %c1_i32 : i32
    %c128_i32 = arith.constant 128 : i32
    %19 = arith.muli %18, %c128_i32 : i32
    %20 = arith.cmpi slt, %17, %19 : i32
    %c128_i32_12 = arith.constant 128 : i32
    %21 = arith.muli %arg1, %c128_i32_12 : i32
    %c1_i32_13 = arith.constant 1 : i32
    %22 = arith.addi %arg0, %c1_i32_13 : i32
    %c64_i32_14 = arith.constant 64 : i32
    %23 = arith.muli %22, %c64_i32_14 : i32
    %24 = arith.cmpi slt, %21, %23 : i32
    %25 = arith.andi %20, %24 : i1
    %c0_i32_15 = arith.constant 0 : i32
    %26 = arith.cmpi eq, %arg1, %c0_i32_15 : i32
    %27 = arith.ori %25, %26 : i1
    %c0_16 = arith.constant 0 : index
    %c0_17 = arith.constant 0 : index
    %28 = vector.load %arg9[%c0_16, %c0_17] : memref<64x1xf32, #tpu.memory_space<vmem>>, vector<64x1xf32>
    %29 = arith.extui %27 : i1 to i32
    %c0_i32_18 = arith.constant 0 : i32
    %30 = arith.cmpi ne, %29, %c0_i32_18 : i32
    scf.if %30 {
      %c64_i32_22 = arith.constant 64 : i32
      %37 = arith.muli %arg0, %c64_i32_22 : i32
      %38 = tpu.iota {dimensions = array<i32: 0>} : vector<64x128xi32>
      %39 = vector.broadcast %37 : i32 to vector<64x128xi32>
      %40 = arith.addi %39, %38 : vector<64x128xi32>
      %c128_i32_23 = arith.constant 128 : i32
      %41 = arith.muli %arg1, %c128_i32_23 : i32
      %42 = tpu.iota {dimensions = array<i32: 1>} : vector<64x128xi32>
      %43 = vector.broadcast %41 : i32 to vector<64x128xi32>
      %44 = arith.addi %43, %42 : vector<64x128xi32>
      %c16_i32 = arith.constant 16 : i32
      %45 = vector.broadcast %c16_i32 : i32 to vector<64x128xi32>
      %46 = arith.cmpi slt, %44, %45 : vector<64x128xi32>
      %47 = arith.cmpi ne, %40, %44 : vector<64x128xi32>
      %48 = arith.andi %46, %47 : vector<64x128xi1>
      %49 = arith.andi %16, %48 : vector<64x128xi1>
      %cst_24 = arith.constant -1.000000e+30 : f32
      %50 = vector.broadcast %cst_24 : f32 to vector<64x128xf32>
      %51 = arith.select %46, %5, %50 : vector<64x128xi1>, vector<64x128xf32>
      %cst_25 = arith.constant dense<0xFF800000> : vector<64xf32>
      %52 = vector.multi_reduction <maximumf>, %51, %cst_25 [1] : vector<64x128xf32> to vector<64xf32>
      %53 = vector.shape_cast %52 : vector<64xf32> to vector<64x1xf32>
      %54 = arith.maximumf %28, %53 : vector<64x1xf32>
      %55 = arith.subf %28, %54 : vector<64x1xf32>
      %56 = math.exp %55 : vector<64x1xf32>
      %57 = vector.broadcast %54 : vector<64x1xf32> to vector<64x128xf32>
      %58 = arith.subf %5, %57 : vector<64x128xf32>
      %59 = math.exp %58 : vector<64x128xf32>
      %cst_26 = arith.constant 0.000000e+00 : f32
      %60 = vector.broadcast %cst_26 : f32 to vector<64x128xf32>
      %61 = arith.select %48, %59, %60 : vector<64x128xi1>, vector<64x128xf32>
      %c0_27 = arith.constant 0 : index
      %c0_28 = arith.constant 0 : index
      %62 = vector.load %arg10[%c0_27, %c0_28] : memref<64x1xf32, #tpu.memory_space<vmem>>, vector<64x1xf32>
      %63 = arith.mulf %56, %62 : vector<64x1xf32>
      %cst_29 = arith.constant dense<0.000000e+00> : vector<64xf32>
      %64 = vector.multi_reduction <add>, %61, %cst_29 [1] : vector<64x128xf32> to vector<64xf32>
      %65 = vector.shape_cast %64 : vector<64xf32> to vector<64x1xf32>
      %66 = arith.addf %63, %65 : vector<64x1xf32>
      %c0_30 = arith.constant 0 : index
      %c0_31 = arith.constant 0 : index
      %67 = vector.load %arg10[%c0_30, %c0_31] : memref<64x1xf32, #tpu.memory_space<vmem>>, vector<64x1xf32>
      tpu.vector_store %arg10[%c0_30, %c0_31], %66 {strides = array<i32>} : memref<64x1xf32, #tpu.memory_space<vmem>>, vector<64x1xf32>,
      %c0_32 = arith.constant 0 : index
      %c0_33 = arith.constant 0 : index
      %68 = vector.load %arg9[%c0_32, %c0_33] : memref<64x1xf32, #tpu.memory_space<vmem>>, vector<64x1xf32>
      tpu.vector_store %arg9[%c0_32, %c0_33], %54 {strides = array<i32>} : memref<64x1xf32, #tpu.memory_space<vmem>>, vector<64x1xf32>,
      %c0_34 = arith.constant 0 : index
      %c0_35 = arith.constant 0 : index
      %69 = vector.load %arg11[%c0_34, %c0_35] : memref<64x1xf32, #tpu.memory_space<vmem>>, vector<64x1xf32>
      %cst_36 = arith.constant 0.000000e+00 : f32
      %70 = vector.broadcast %cst_36 : f32 to vector<64x128xf32>
      %71 = arith.select %49, %5, %70 : vector<64x128xi1>, vector<64x128xf32>
      %cst_37 = arith.constant dense<0.000000e+00> : vector<64xf32>
      %72 = vector.multi_reduction <add>, %71, %cst_37 [1] : vector<64x128xf32> to vector<64xf32>
      %73 = vector.shape_cast %72 : vector<64xf32> to vector<64x1xf32>
      %74 = arith.addf %69, %73 : vector<64x1xf32>
      %c0_38 = arith.constant 0 : index
      %c0_39 = arith.constant 0 : index
      %75 = vector.load %arg11[%c0_38, %c0_39] : memref<64x1xf32, #tpu.memory_space<vmem>>, vector<64x1xf32>
      tpu.vector_store %arg11[%c0_38, %c0_39], %74 {strides = array<i32>} : memref<64x1xf32, #tpu.memory_space<vmem>>, vector<64x1xf32>,
      %c0_40 = arith.constant 0 : index
      %c0_41 = arith.constant 0 : index
      %76 = vector.load %arg12[%c0_40, %c0_41] : memref<64x1xf32, #tpu.memory_space<vmem>>, vector<64x1xf32>
      %77 = arith.extui %49 : vector<64x128xi1> to vector<64x128xi32>
      %78 = arith.sitofp %77 : vector<64x128xi32> to vector<64x128xf32>
      %cst_42 = arith.constant dense<0.000000e+00> : vector<64xf32>
      %79 = vector.multi_reduction <add>, %78, %cst_42 [1] : vector<64x128xf32> to vector<64xf32>
      %80 = vector.shape_cast %79 : vector<64xf32> to vector<64x1xf32>
      %81 = arith.addf %76, %80 : vector<64x1xf32>
      %c0_43 = arith.constant 0 : index
      %c0_44 = arith.constant 0 : index
      %82 = vector.load %arg12[%c0_43, %c0_44] : memref<64x1xf32, #tpu.memory_space<vmem>>, vector<64x1xf32>
      tpu.vector_store %arg12[%c0_43, %c0_44], %81 {strides = array<i32>} : memref<64x1xf32, #tpu.memory_space<vmem>>, vector<64x1xf32>,
    } else {
    }
    %true = arith.constant true
    %31 = arith.xori %27, %true : i1
    %32 = arith.extui %31 : i1 to i32
    %c0_i32_19 = arith.constant 0 : i32
    %33 = arith.cmpi ne, %32, %c0_i32_19 : i32
    scf.if %33 {
      %cst_22 = arith.constant dense<0xFF800000> : vector<64xf32>
      %37 = vector.multi_reduction <maximumf>, %5, %cst_22 [1] : vector<64x128xf32> to vector<64xf32>
      %38 = vector.shape_cast %37 : vector<64xf32> to vector<64x1xf32>
      %39 = arith.maximumf %28, %38 : vector<64x1xf32>
      %40 = arith.subf %28, %39 : vector<64x1xf32>
      %41 = math.exp %40 : vector<64x1xf32>
      %42 = vector.broadcast %39 : vector<64x1xf32> to vector<64x128xf32>
      %43 = arith.subf %5, %42 : vector<64x128xf32>
      %44 = math.exp %43 : vector<64x128xf32>
      %c0_23 = arith.constant 0 : index
      %c0_24 = arith.constant 0 : index
      %45 = vector.load %arg10[%c0_23, %c0_24] : memref<64x1xf32, #tpu.memory_space<vmem>>, vector<64x1xf32>
      %46 = arith.mulf %41, %45 : vector<64x1xf32>
      %cst_25 = arith.constant dense<0.000000e+00> : vector<64xf32>
      %47 = vector.multi_reduction <add>, %44, %cst_25 [1] : vector<64x128xf32> to vector<64xf32>
      %48 = vector.shape_cast %47 : vector<64xf32> to vector<64x1xf32>
      %49 = arith.addf %46, %48 : vector<64x1xf32>
      %c0_26 = arith.constant 0 : index
      %c0_27 = arith.constant 0 : index
      %50 = vector.load %arg10[%c0_26, %c0_27] : memref<64x1xf32, #tpu.memory_space<vmem>>, vector<64x1xf32>
      tpu.vector_store %arg10[%c0_26, %c0_27], %49 {strides = array<i32>} : memref<64x1xf32, #tpu.memory_space<vmem>>, vector<64x1xf32>,
      %c0_28 = arith.constant 0 : index
      %c0_29 = arith.constant 0 : index
      %51 = vector.load %arg9[%c0_28, %c0_29] : memref<64x1xf32, #tpu.memory_space<vmem>>, vector<64x1xf32>
      tpu.vector_store %arg9[%c0_28, %c0_29], %39 {strides = array<i32>} : memref<64x1xf32, #tpu.memory_space<vmem>>, vector<64x1xf32>,
      %c0_30 = arith.constant 0 : index
      %c0_31 = arith.constant 0 : index
      %52 = vector.load %arg11[%c0_30, %c0_31] : memref<64x1xf32, #tpu.memory_space<vmem>>, vector<64x1xf32>
      %cst_32 = arith.constant 0.000000e+00 : f32
      %53 = vector.broadcast %cst_32 : f32 to vector<64x128xf32>
      %54 = arith.select %16, %5, %53 : vector<64x128xi1>, vector<64x128xf32>
      %cst_33 = arith.constant dense<0.000000e+00> : vector<64xf32>
      %55 = vector.multi_reduction <add>, %54, %cst_33 [1] : vector<64x128xf32> to vector<64xf32>
      %56 = vector.shape_cast %55 : vector<64xf32> to vector<64x1xf32>
      %57 = arith.addf %52, %56 : vector<64x1xf32>
      %c0_34 = arith.constant 0 : index
      %c0_35 = arith.constant 0 : index
      %58 = vector.load %arg11[%c0_34, %c0_35] : memref<64x1xf32, #tpu.memory_space<vmem>>, vector<64x1xf32>
      tpu.vector_store %arg11[%c0_34, %c0_35], %57 {strides = array<i32>} : memref<64x1xf32, #tpu.memory_space<vmem>>, vector<64x1xf32>,
      %c0_36 = arith.constant 0 : index
      %c0_37 = arith.constant 0 : index
      %59 = vector.load %arg12[%c0_36, %c0_37] : memref<64x1xf32, #tpu.memory_space<vmem>>, vector<64x1xf32>
      %60 = arith.extui %16 : vector<64x128xi1> to vector<64x128xi32>
      %61 = arith.sitofp %60 : vector<64x128xi32> to vector<64x128xf32>
      %cst_38 = arith.constant dense<0.000000e+00> : vector<64xf32>
      %62 = vector.multi_reduction <add>, %61, %cst_38 [1] : vector<64x128xf32> to vector<64xf32>
      %63 = vector.shape_cast %62 : vector<64xf32> to vector<64x1xf32>
      %64 = arith.addf %59, %63 : vector<64x1xf32>
      %c0_39 = arith.constant 0 : index
      %c0_40 = arith.constant 0 : index
      %65 = vector.load %arg12[%c0_39, %c0_40] : memref<64x1xf32, #tpu.memory_space<vmem>>, vector<64x1xf32>
      tpu.vector_store %arg12[%c0_39, %c0_40], %64 {strides = array<i32>} : memref<64x1xf32, #tpu.memory_space<vmem>>, vector<64x1xf32>,
    } else {
    }
    %c0_i32_20 = arith.constant 0 : i32
    %34 = arith.cmpi eq, %arg1, %c0_i32_20 : i32
    %35 = arith.extui %34 : i1 to i32
    %c0_i32_21 = arith.constant 0 : i32
    %36 = arith.cmpi ne, %35, %c0_i32_21 : i32
    scf.if %36 {
      %c0_22 = arith.constant 0 : index
      %c0_23 = arith.constant 0 : index
      %37 = vector.load %arg12[%c0_22, %c0_23] : memref<64x1xf32, #tpu.memory_space<vmem>>, vector<64x1xf32>
      %cst_24 = arith.constant 0.000000e+00 : f32
      %38 = vector.broadcast %cst_24 : f32 to vector<64x1xf32>
      %39 = arith.cmpf ogt, %37, %38 : vector<64x1xf32>
      %c0_25 = arith.constant 0 : index
      %c0_26 = arith.constant 0 : index
      %40 = vector.load %arg11[%c0_25, %c0_26] : memref<64x1xf32, #tpu.memory_space<vmem>>, vector<64x1xf32>
      %cst_27 = arith.constant 1.000000e+00 : f32
      %41 = vector.broadcast %cst_27 : f32 to vector<64x1xf32>
      %42 = arith.select %39, %37, %41 : vector<64x1xi1>, vector<64x1xf32>
      %43 = arith.divf %40, %42 : vector<64x1xf32>
      %c0_28 = arith.constant 0 : index
      %c0_29 = arith.constant 0 : index
      %44 = vector.load %arg9[%c0_28, %c0_29] : memref<64x1xf32, #tpu.memory_space<vmem>>, vector<64x1xf32>
      %45 = arith.subf %43, %44 : vector<64x1xf32>
      %c0_30 = arith.constant 0 : index
      %c0_31 = arith.constant 0 : index
      %46 = vector.load %arg10[%c0_30, %c0_31] : memref<64x1xf32, #tpu.memory_space<vmem>>, vector<64x1xf32>
      %cst_32 = arith.constant 9.99999971E-10 : f32
      %47 = vector.broadcast %cst_32 : f32 to vector<64x1xf32>
      %48 = arith.addf %46, %47 : vector<64x1xf32>
      %49 = math.log %48 : vector<64x1xf32>
      %50 = arith.subf %45, %49 : vector<64x1xf32>
      %cst_33 = arith.constant 0.000000e+00 : f32
      %51 = vector.broadcast %cst_33 : f32 to vector<64x1xf32>
      %52 = arith.subf %51, %50 : vector<64x1xf32>
      %cst_34 = arith.constant 0.000000e+00 : f32
      %53 = vector.broadcast %cst_34 : f32 to vector<64x1xf32>
      %54 = arith.select %39, %52, %53 : vector<64x1xi1>, vector<64x1xf32>
      %55 = vector.shape_cast %54 : vector<64x1xf32> to vector<64x1xf32>
      %56 = vector.broadcast %55 : vector<64x1xf32> to vector<64x128xf32>
      %c0_35 = arith.constant 0 : index
      %c0_36 = arith.constant 0 : index
      %57 = vector.load %arg8[%c0_35, %c0_36] : memref<64x128xf32, #tpu.memory_space<vmem>>, vector<64x128xf32>
      tpu.vector_store %arg8[%c0_35, %c0_36], %56 {strides = array<i32>} : memref<64x128xf32, #tpu.memory_space<vmem>>, vector<64x128xf32>,
    } else {
    }
    return
  }
  func.func @transform_0(%arg0: i32, %arg1: i32) -> (i32, i32) {
    %c0_i32 = arith.constant 0 : i32
    %c0_i32_0 = arith.constant 0 : i32
    return %arg0, %c0_i32 : i32, i32
  }
  func.func @transform_1(%arg0: i32, %arg1: i32) -> (i32, i32) {
    %c0_i32 = arith.constant 0 : i32
    %c0_i32_0 = arith.constant 0 : i32
    return %arg1, %c0_i32 : i32, i32
  }
  func.func @transform_2(%arg0: i32, %arg1: i32) -> (i32, i32) {
    %c0_i32 = arith.constant 0 : i32
    %c0_i32_0 = arith.constant 0 : i32
    return %arg0, %c0_i32 : i32, i32
  }
  func.func @transform_3(%arg0: i32, %arg1: i32) -> (i32, i32) {
    %c0_i32 = arith.constant 0 : i32
    %c0_i32_0 = arith.constant 0 : i32
    return %c0_i32, %arg1 : i32, i32
  }
  func.func @transform_4(%arg0: i32, %arg1: i32) -> (i32, i32) {
    %c0_i32 = arith.constant 0 : i32
    %c0_i32_0 = arith.constant 0 : i32
    return %arg0, %c0_i32 : i32, i32
  }
  func.func @transform_5(%arg0: i32, %arg1: i32) -> (i32, i32) {
    %c0_i32 = arith.constant 0 : i32
    %c0_i32_0 = arith.constant 0 : i32
    return %c0_i32, %arg1 : i32, i32
  }
  func.func @transform_6(%arg0: i32, %arg1: i32) -> (i32, i32) {
    %c0_i32 = arith.constant 0 : i32
    %c0_i32_0 = arith.constant 0 : i32
    return %arg0, %c0_i32 : i32, i32
  }
}

</mosaic_0001>

<llo_original>
// kernel: tpu_custom_call.1
$region0: #{tpu_custom_call.1}
  #allocation0 [shape = 'u32[]', space=smem, size = 0x4, offset = 0x4, fixed_abs, tag = 'smem constant byte address 0x4 - core index']
  #allocation1 [shape = 'u32[144,128]{1,0:T(1,128)}', space=vmem, size = 0x12000, scoped, tag = 'internal scratch']
  #allocation2 [shape = 'f32[64,1]{1,0:T(8,128)}', space=vmem, size = 0x8000, scoped, tag = 'scratch operand']
  #allocation3 [shape = 'f32[64,1]{1,0:T(8,128)}', space=vmem, size = 0x8000, scoped, tag = 'scratch operand']
  #allocation4 [shape = 'f32[64,1]{1,0:T(8,128)}', space=vmem, size = 0x8000, scoped, tag = 'scratch operand']
  #allocation5 [shape = 'f32[64,1]{1,0:T(8,128)}', space=vmem, size = 0x8000, scoped, tag = 'scratch operand']
  %s0 = inlined_call_operand.vmem [shape: bf16[128,32], index: 0, kind: input, shape index: {}]
  %s1 = inlined_call_operand.vmem [shape: bf16[128,32], index: 1, kind: input, shape index: {}]
  %s2 = inlined_call_operand.vmem [shape: s32[128,1], index: 2, kind: input, shape index: {}]
  %s3 = inlined_call_operand.vmem [shape: s32[1,128], index: 3, kind: input, shape index: {}]
  %s4 = inlined_call_operand.vmem [shape: s32[128,1], index: 4, kind: input, shape index: {}]
  %s5 = inlined_call_operand.vmem [shape: s32[1,128], index: 5, kind: input, shape index: {}]
  %s6 = inlined_call_operand.hbm [shape: f32[128,128], index: 6, kind: output, shape index: {}]
  %s7 = sld [smem:[#allocation0]]
  $region73: #{tpu_custom_call.1} parent=0
    _
  %s9 = ssub.s32 1, %s7
  %s10 = scalar_select 0, %s9, %s7
  $region1: #{tpu_custom_call.1} parent=0
    #allocation6 [shape = 'u8[65536]{0}', space=vmem, size = 0x10000, scoped, tag = 'output window, operand 0']
    #allocation7 [shape = 's32[2]{0}', space=sflag, size = 0x8, scoped, tag = 'scoped memory for tpu_custom_call.1']
    %11 = vsyncpa [#allocation7], 0
    %s12 = scalar_lea.sflag [#allocation7], 1
    %13 = vsyncpa %s12, 0
    loop: start=0, step=1, limit=4
    $region2: #{tpu_custom_call.1} parent=1 // loop_pre_header
      _
    $region3: #{tpu_custom_call.1} parent=1 // loop_header
      %s15 = sphi 0, %s19
      %p16 = scmp.ge.s32.totalorder %s15, 4
      %s22 = sphi 0, %s34
      %s23 = sphi 0, %s30
      %s24 = sphi 0, %s22
      %s25 = sphi 0, %s23
      %s26 = sphi 0, %s24
      %s27 = sphi 0, %s25
      %s37 = sphi 0, %s39
      %s40 = sphi 0, %s37
      %s41 = sphi 0, %s40
      %s57 = sphi 0, %s41
      %s63 = sphi 0, %s65
      %s66 = sphi 0, %s63
      %s67 = sphi 0, %s66
      %s83 = sphi 0, %s67
      %s89 = sphi 0, %s91
      %s92 = sphi 0, %s89
      %s93 = sphi 0, %s92
      %s109 = sphi 0, %s93
      %s115 = sphi 0, %s117
      %s118 = sphi 0, %s115
      %s119 = sphi 0, %s118
      %s135 = sphi 0, %s119
      %s141 = sphi 0, %s143
      %s144 = sphi 0, %s141
      %s145 = sphi 0, %s144
      %s161 = sphi 0, %s145
      %s167 = sphi 0, %s169
      %s170 = sphi 0, %s167
      %s171 = sphi 0, %s170
      %s187 = sphi 0, %s171
      %s193 = sphi 0, %s195
      %s196 = sphi 0, %s193
      %s197 = sphi 0, %s196
      %s213 = sphi 0, %s197
    $region4: #{tpu_custom_call.1} parent=1 // loop_header_branch
      %18 = sbr.rel (%p16) target = $region8
    $region5: #{tpu_custom_call.1} parent=1 // loop_body
      %s20 = ssub.s32 %s15, 1
      %s21 = ssub.s32 %s15, 2
      %s28 = sadd.s32 1, %s23
      %p29 = scmp.ge.s32.totalorder %s28, 1
      %s30 = scalar_select %p29, 0, %s28
      %s31 = sadd.s32 1, %s22
      %s32 = scalar_select %p29, %s31, %s22
      %p33 = scmp.ge.s32.totalorder %s32, 2
      %s34 = scalar_select %p33, 0, %s32
      %s35 = ssub.s32 %s22, %s34
      %p36 = scmp.eq.s32.totalorder %s35, 0
      %s38 = sadd.s32 %s37, 1
      %s39 = scalar_select %p36, %s37, %s38
      %p42 = pneg %p36
      %p43 = scmp.eq.s32.totalorder %s15, 1
      %p44 = por %p42, %p43
      %p45 = scmp.ne.s32.totalorder %s37, %s40
      %p46 = scmp.eq.s32.totalorder %s15, 0
      %p47 = por %p45, %p46
      %p48 = scmp.ne.s32.totalorder %s37, %s40
      %p49 = scmp.eq.s32.totalorder %s20, 1
      %p50 = por %p48, %p49
      %p51 = scmp.ne.s32.totalorder %s40, %s41
      %p52 = scmp.eq.s32.totalorder %s20, 0
      %p53 = por %p51, %p52
      %p54 = scmp.ne.s32.totalorder %s40, %s41
      %p55 = scmp.eq.s32.totalorder %s21, 1
      %p56 = por %p54, %p55
      %p58 = scmp.ne.s32.totalorder %s41, %s57
      %p59 = scmp.eq.s32.totalorder %s21, 0
      %p60 = por %p58, %p59
      %s61 = ssub.s32 %s23, %s30
      %p62 = scmp.eq.s32.totalorder %s61, 0
      %s64 = sadd.s32 %s63, 1
      %s65 = scalar_select %p62, %s63, %s64
      %p68 = pneg %p62
      %p69 = scmp.eq.s32.totalorder %s15, 1
      %p70 = por %p68, %p69
      %p71 = scmp.ne.s32.totalorder %s63, %s66
      %p72 = scmp.eq.s32.totalorder %s15, 0
      %p73 = por %p71, %p72
      %p74 = scmp.ne.s32.totalorder %s63, %s66
      %p75 = scmp.eq.s32.totalorder %s20, 1
      %p76 = por %p74, %p75
      %p77 = scmp.ne.s32.totalorder %s66, %s67
      %p78 = scmp.eq.s32.totalorder %s20, 0
      %p79 = por %p77, %p78
      %p80 = scmp.ne.s32.totalorder %s66, %s67
      %p81 = scmp.eq.s32.totalorder %s21, 1
      %p82 = por %p80, %p81
      %p84 = scmp.ne.s32.totalorder %s67, %s83
      %p85 = scmp.eq.s32.totalorder %s21, 0
      %p86 = por %p84, %p85
      %s87 = ssub.s32 %s22, %s34
      %p88 = scmp.eq.s32.totalorder %s87, 0
      %s90 = sadd.s32 %s89, 1
      %s91 = scalar_select %p88, %s89, %s90
      %p94 = pneg %p88
      %p95 = scmp.eq.s32.totalorder %s15, 1
      %p96 = por %p94, %p95
      %p97 = scmp.ne.s32.totalorder %s89, %s92
      %p98 = scmp.eq.s32.totalorder %s15, 0
      %p99 = por %p97, %p98
      %p100 = scmp.ne.s32.totalorder %s89, %s92
      %p101 = scmp.eq.s32.totalorder %s20, 1
      %p102 = por %p100, %p101
      %p103 = scmp.ne.s32.totalorder %s92, %s93
      %p104 = scmp.eq.s32.totalorder %s20, 0
      %p105 = por %p103, %p104
      %p106 = scmp.ne.s32.totalorder %s92, %s93
      %p107 = scmp.eq.s32.totalorder %s21, 1
      %p108 = por %p106, %p107
      %p110 = scmp.ne.s32.totalorder %s93, %s109
      %p111 = scmp.eq.s32.totalorder %s21, 0
      %p112 = por %p110, %p111
      %s113 = ssub.s32 %s23, %s30
      %p114 = scmp.eq.s32.totalorder %s113, 0
      %s116 = sadd.s32 %s115, 1
      %s117 = scalar_select %p114, %s115, %s116
      %p120 = pneg %p114
      %p121 = scmp.eq.s32.totalorder %s15, 1
      %p122 = por %p120, %p121
      %p123 = scmp.ne.s32.totalorder %s115, %s118
      %p124 = scmp.eq.s32.totalorder %s15, 0
      %p125 = por %p123, %p124
      %p126 = scmp.ne.s32.totalorder %s115, %s118
      %p127 = scmp.eq.s32.totalorder %s20, 1
      %p128 = por %p126, %p127
      %p129 = scmp.ne.s32.totalorder %s118, %s119
      %p130 = scmp.eq.s32.totalorder %s20, 0
      %p131 = por %p129, %p130
      %p132 = scmp.ne.s32.totalorder %s118, %s119
      %p133 = scmp.eq.s32.totalorder %s21, 1
      %p134 = por %p132, %p133
      %p136 = scmp.ne.s32.totalorder %s119, %s135
      %p137 = scmp.eq.s32.totalorder %s21, 0
      %p138 = por %p136, %p137
      %s139 = ssub.s32 %s22, %s34
      %p140 = scmp.eq.s32.totalorder %s139, 0
      %s142 = sadd.s32 %s141, 1
      %s143 = scalar_select %p140, %s141, %s142
      %p146 = pneg %p140
      %p147 = scmp.eq.s32.totalorder %s15, 1
      %p148 = por %p146, %p147
      %p149 = scmp.ne.s32.totalorder %s141, %s144
      %p150 = scmp.eq.s32.totalorder %s15, 0
      %p151 = por %p149, %p150
      %p152 = scmp.ne.s32.totalorder %s141, %s144
      %p153 = scmp.eq.s32.totalorder %s20, 1
      %p154 = por %p152, %p153
      %p155 = scmp.ne.s32.totalorder %s144, %s145
      %p156 = scmp.eq.s32.totalorder %s20, 0
      %p157 = por %p155, %p156
      %p158 = scmp.ne.s32.totalorder %s144, %s145
      %p159 = scmp.eq.s32.totalorder %s21, 1
      %p160 = por %p158, %p159
      %p162 = scmp.ne.s32.totalorder %s145, %s161
      %p163 = scmp.eq.s32.totalorder %s21, 0
      %p164 = por %p162, %p163
      %s165 = ssub.s32 %s23, %s30
      %p166 = scmp.eq.s32.totalorder %s165, 0
      %s168 = sadd.s32 %s167, 1
      %s169 = scalar_select %p166, %s167, %s168
      %p172 = pneg %p166
      %p173 = scmp.eq.s32.totalorder %s15, 1
      %p174 = por %p172, %p173
      %p175 = scmp.ne.s32.totalorder %s167, %s170
      %p176 = scmp.eq.s32.totalorder %s15, 0
      %p177 = por %p175, %p176
      %p178 = scmp.ne.s32.totalorder %s167, %s170
      %p179 = scmp.eq.s32.totalorder %s20, 1
      %p180 = por %p178, %p179
      %p181 = scmp.ne.s32.totalorder %s170, %s171
      %p182 = scmp.eq.s32.totalorder %s20, 0
      %p183 = por %p181, %p182
      %p184 = scmp.ne.s32.totalorder %s170, %s171
      %p185 = scmp.eq.s32.totalorder %s21, 1
      %p186 = por %p184, %p185
      %p188 = scmp.ne.s32.totalorder %s171, %s187
      %p189 = scmp.eq.s32.totalorder %s21, 0
      %p190 = por %p188, %p189
      %s191 = ssub.s32 %s22, %s34
      %p192 = scmp.eq.s32.totalorder %s191, 0
      %s194 = sadd.s32 %s193, 1
      %s195 = scalar_select %p192, %s193, %s194
      %p198 = pneg %p192
      %p199 = scmp.eq.s32.totalorder %s15, 1
      %p200 = por %p198, %p199
      %p201 = scmp.ne.s32.totalorder %s193, %s196
      %p202 = scmp.eq.s32.totalorder %s15, 0
      %p203 = por %p201, %p202
      %p204 = scmp.ne.s32.totalorder %s193, %s196
      %p205 = scmp.eq.s32.totalorder %s20, 1
      %p206 = por %p204, %p205
      %p207 = scmp.ne.s32.totalorder %s196, %s197
      %p208 = scmp.eq.s32.totalorder %s20, 0
      %p209 = por %p207, %p208
      %p210 = scmp.ne.s32.totalorder %s196, %s197
      %p211 = scmp.eq.s32.totalorder %s21, 1
      %p212 = por %p210, %p211
      %p214 = scmp.ne.s32.totalorder %s197, %s213
      %p215 = scmp.eq.s32.totalorder %s21, 0
      %p216 = por %p214, %p215
      %p217 = scmp.le.s32.totalorder 1, %s15
      %p218 = scmp.lt.s32.totalorder %s15, 3
      %p219 = pnand %p217, %p218
      %p220 = pneg %p219
      // Predicated region
      $region9: #{tpu_custom_call.1} parent=5 // pred_check
        _
      $region10: #{tpu_custom_call.1} parent=5 // pred_check_branch
        %222 = sbr.rel (%p219) target = $region12
      $region11: #{tpu_custom_call.1} parent=5 // pred_region
        %s223 = ssub.s32 %s15, 1
        // Predicated region
        $region13: #{tpu_custom_call.1} parent=11 // pred_check
          %p224 = pneg %p79
        $region14: #{tpu_custom_call.1} parent=11 // pred_check_branch
          %226 = sbr.rel (%p224) target = $region16
        $region15: #{tpu_custom_call.1} parent=11 // pred_region
          %s227 = smul.u32 16, %s25
          %p228 = scmp.lt.s32.totalorder %s227, 15
          %s229 = scalar_select %p228, %s227, 15
          %s230 = smul.addr %s229, 4
          %s231 = scalar_lea.vmem %s1, %s230
          %s232 = smul.u32 16, %s25
        $region16: #{tpu_custom_call.1} parent=11 // pred_fallthru
          _
        // Predicated region
        $region17: #{tpu_custom_call.1} parent=11 // pred_check
          %p233 = pneg %p131
        $region18: #{tpu_custom_call.1} parent=11 // pred_check_branch
          %235 = sbr.rel (%p233) target = $region20
        $region19: #{tpu_custom_call.1} parent=11 // pred_region
          %p236 = scmp.lt.s32.totalorder %s25, 0
          %s237 = scalar_select %p236, %s25, 0
          %s238 = scalar_lea.vmem %s3, %s237
        $region20: #{tpu_custom_call.1} parent=11 // pred_fallthru
          _
        // Predicated region
        $region21: #{tpu_custom_call.1} parent=11 // pred_check
          %p239 = pneg %p183
        $region22: #{tpu_custom_call.1} parent=11 // pred_check_branch
          %241 = sbr.rel (%p239) target = $region24
        $region23: #{tpu_custom_call.1} parent=11 // pred_region
          %p242 = scmp.lt.s32.totalorder %s25, 0
          %s243 = scalar_select %p242, %s25, 0
          %s244 = scalar_lea.vmem %s5, %s243
        $region24: #{tpu_custom_call.1} parent=11 // pred_fallthru
          _
      $region12: #{tpu_custom_call.1} parent=5 // pred_fallthru
        _
      %p245 = scmp.lt.s32.totalorder %s15, 2
      // Predicated region
      $region25: #{tpu_custom_call.1} parent=5 // pred_check
        %p246 = pneg %p245
      $region26: #{tpu_custom_call.1} parent=5 // pred_check_branch
        %248 = sbr.rel (%p246) target = $region28
      $region27: #{tpu_custom_call.1} parent=5 // pred_region
        // Predicated region
        $region29: #{tpu_custom_call.1} parent=27 // pred_check
          %p249 = pneg %p47
        $region30: #{tpu_custom_call.1} parent=27 // pred_check_branch
          %251 = sbr.rel (%p249) target = $region32
        $region31: #{tpu_custom_call.1} parent=27 // pred_region
          %s252 = smul.u32 8, %s22
          %p253 = scmp.lt.s32.totalorder %s252, 15
          %s254 = scalar_select %p253, %s252, 15
          %s255 = smul.addr %s254, 4
          %s256 = scalar_lea.vmem %s0, %s255
          %s257 = smul.u32 8, %s22
        $region32: #{tpu_custom_call.1} parent=27 // pred_fallthru
          _
        // Predicated region
        $region33: #{tpu_custom_call.1} parent=27 // pred_check
          %p258 = pneg %p99
        $region34: #{tpu_custom_call.1} parent=27 // pred_check_branch
          %260 = sbr.rel (%p258) target = $region36
        $region35: #{tpu_custom_call.1} parent=27 // pred_region
          %s261 = smul.u32 8, %s22
          %p262 = scmp.lt.s32.totalorder %s261, 15
          %s263 = scalar_select %p262, %s261, 15
          %s264 = smul.addr %s263, 8
          %s265 = scalar_lea.vmem %s2, %s264
          %s266 = smul.u32 8, %s22
        $region36: #{tpu_custom_call.1} parent=27 // pred_fallthru
          _
        // Predicated region
        $region37: #{tpu_custom_call.1} parent=27 // pred_check
          %p267 = pneg %p151
        $region38: #{tpu_custom_call.1} parent=27 // pred_check_branch
          %269 = sbr.rel (%p267) target = $region40
        $region39: #{tpu_custom_call.1} parent=27 // pred_region
          %s270 = smul.u32 8, %s22
          %p271 = scmp.lt.s32.totalorder %s270, 15
          %s272 = scalar_select %p271, %s270, 15
          %s273 = smul.addr %s272, 8
          %s274 = scalar_lea.vmem %s4, %s273
          %s275 = smul.u32 8, %s22
        $region40: #{tpu_custom_call.1} parent=27 // pred_fallthru
          _
      $region28: #{tpu_custom_call.1} parent=5 // pred_fallthru
        _
      %p276 = scmp.le.s32.totalorder 1, %s15
      %p277 = scmp.lt.s32.totalorder %s15, 3
      %p278 = pnand %p276, %p277
      %p279 = pneg %p278
      // Predicated region
      $region41: #{tpu_custom_call.1} parent=5 // pred_check
        _
      $region42: #{tpu_custom_call.1} parent=5 // pred_check_branch
        %281 = sbr.rel (%p278) target = $region44
      $region43: #{tpu_custom_call.1} parent=5 // pred_region
        %s282 = ssub.s32 %s15, 1
        %s283 = smul.u32 8, %s24
        %p284 = scmp.lt.s32.totalorder %s283, 15
        %s285 = scalar_select %p284, %s283, 15
        %s286 = smul.addr %s285, 4
        %s287 = scalar_lea.vmem %s0, %s286
        %p288 = pneg %p53
        %p289 = pneg %p50
        %s290 = smul.u32 16, %s25
        %p291 = scmp.lt.s32.totalorder %s290, 15
        %s292 = scalar_select %p291, %s290, 15
        %s293 = smul.addr %s292, 4
        %s294 = scalar_lea.vmem %s1, %s293
        %p295 = pneg %p79
        %p296 = pneg %p76
        %s297 = smul.u32 8, %s24
        %p298 = scmp.lt.s32.totalorder %s297, 15
        %s299 = scalar_select %p298, %s297, 15
        %s300 = smul.addr %s299, 8
        %s301 = scalar_lea.vmem %s2, %s300
        %p302 = pneg %p105
        %p303 = pneg %p102
        %p304 = scmp.lt.s32.totalorder %s25, 0
        %s305 = scalar_select %p304, %s25, 0
        %s306 = scalar_lea.vmem %s3, %s305
        %p307 = pneg %p131
        %p308 = pneg %p128
        %s309 = smul.u32 8, %s24
        %p310 = scmp.lt.s32.totalorder %s309, 15
        %s311 = scalar_select %p310, %s309, 15
        %s312 = smul.addr %s311, 8
        %s313 = scalar_lea.vmem %s4, %s312
        %p314 = pneg %p157
        %p315 = pneg %p154
        %p316 = scmp.lt.s32.totalorder %s25, 0
        %s317 = scalar_select %p316, %s25, 0
        %s318 = scalar_lea.vmem %s5, %s317
        %p319 = pneg %p183
        %p320 = pneg %p180
        %p321 = pneg %p209
        %p322 = pneg %p206
        %s323 = sand.u32 %s196, 1
        %s324 = scalar_lea.sflag [#allocation7], %s323
        %s325 = sand.u32 %s196, 1
        %s326 = smul.addr %s325, 64
        %s327 = scalar_lea.vmem [#allocation6], %s326
        %s328 = smul.u32 8, %s24
        %p329 = scmp.lt.s32.totalorder %s328, 15
        %s330 = scalar_select %p329, %s328, 15
        %s331 = smul.addr %s330, 4
        %s332 = scalar_lea.vmem %s0, %s331
        %s333 = smul.u32 8, %s24
        %s334 = smul.u32 16, %s25
        %p335 = scmp.lt.s32.totalorder %s334, 15
        %s336 = scalar_select %p335, %s334, 15
        %s337 = smul.addr %s336, 4
        %s338 = scalar_lea.vmem %s1, %s337
        %s339 = smul.u32 16, %s25
        %s340 = smul.u32 8, %s24
        %p341 = scmp.lt.s32.totalorder %s340, 15
        %s342 = scalar_select %p341, %s340, 15
        %s343 = smul.addr %s342, 8
        %s344 = scalar_lea.vmem %s2, %s343
        %s345 = smul.u32 8, %s24
        %p346 = scmp.lt.s32.totalorder %s25, 0
        %s347 = scalar_select %p346, %s25, 0
        %s348 = scalar_lea.vmem %s3, %s347
        %s349 = smul.u32 8, %s24
        %p350 = scmp.lt.s32.totalorder %s349, 15
        %s351 = scalar_select %p350, %s349, 15
        %s352 = smul.addr %s351, 8
        %s353 = scalar_lea.vmem %s4, %s352
        %s354 = smul.u32 8, %s24
        %p355 = scmp.lt.s32.totalorder %s25, 0
        %s356 = scalar_select %p355, %s25, 0
        %s357 = scalar_lea.vmem %s5, %s356
        %s358 = smul.u32 8, %s24
        %p360 = scmp.eq.s32.totalorder %s25, 0
        // Predicated region
        $region45: #{tpu_custom_call.1} parent=43 // pred_check
          %p361 = pneg %p360
        $region46: #{tpu_custom_call.1} parent=43 // pred_check_branch
          %363 = sbr.rel (%p361) target = $region48
        $region47: #{tpu_custom_call.1} parent=43 // pred_region
          %vm364 = vcmask 7168
          %365 = vst.msk [vmem:[#allocation2] sm:$0xff] %vm364, -1e+30
          %366 = vst.msk [vmem:[#allocation2 + $0x8] sm:$0xff] %vm364, -1e+30
          %367 = vst.msk [vmem:[#allocation2 + $0x10] sm:$0xff] %vm364, -1e+30
          %368 = vst.msk [vmem:[#allocation2 + $0x18] sm:$0xff] %vm364, -1e+30
          %369 = vst.msk [vmem:[#allocation2 + $0x20] sm:$0xff] %vm364, -1e+30
          %370 = vst.msk [vmem:[#allocation2 + $0x28] sm:$0xff] %vm364, -1e+30
          %371 = vst.msk [vmem:[#allocation2 + $0x30] sm:$0xff] %vm364, -1e+30
          %372 = vst.msk [vmem:[#allocation2 + $0x38] sm:$0xff] %vm364, -1e+30
          %373 = vst.msk [vmem:[#allocation3] sm:$0xff] %vm364, 0.0
          %374 = vst.msk [vmem:[#allocation3 + $0x8] sm:$0xff] %vm364, 0.0
          %375 = vst.msk [vmem:[#allocation3 + $0x10] sm:$0xff] %vm364, 0.0
          %376 = vst.msk [vmem:[#allocation3 + $0x18] sm:$0xff] %vm364, 0.0
          %377 = vst.msk [vmem:[#allocation3 + $0x20] sm:$0xff] %vm364, 0.0
          %378 = vst.msk [vmem:[#allocation3 + $0x28] sm:$0xff] %vm364, 0.0
          %379 = vst.msk [vmem:[#allocation3 + $0x30] sm:$0xff] %vm364, 0.0
          %380 = vst.msk [vmem:[#allocation3 + $0x38] sm:$0xff] %vm364, 0.0
          %381 = vst.msk [vmem:[#allocation4] sm:$0xff] %vm364, 0.0
          %382 = vst.msk [vmem:[#allocation4 + $0x8] sm:$0xff] %vm364, 0.0
          %383 = vst.msk [vmem:[#allocation4 + $0x10] sm:$0xff] %vm364, 0.0
          %384 = vst.msk [vmem:[#allocation4 + $0x18] sm:$0xff] %vm364, 0.0
          %385 = vst.msk [vmem:[#allocation4 + $0x20] sm:$0xff] %vm364, 0.0
          %386 = vst.msk [vmem:[#allocation4 + $0x28] sm:$0xff] %vm364, 0.0
          %387 = vst.msk [vmem:[#allocation4 + $0x30] sm:$0xff] %vm364, 0.0
          %388 = vst.msk [vmem:[#allocation4 + $0x38] sm:$0xff] %vm364, 0.0
          %389 = vst.msk [vmem:[#allocation5] sm:$0xff] %vm364, 0.0
          %390 = vst.msk [vmem:[#allocation5 + $0x8] sm:$0xff] %vm364, 0.0
          %391 = vst.msk [vmem:[#allocation5 + $0x10] sm:$0xff] %vm364, 0.0
          %392 = vst.msk [vmem:[#allocation5 + $0x18] sm:$0xff] %vm364, 0.0
          %393 = vst.msk [vmem:[#allocation5 + $0x20] sm:$0xff] %vm364, 0.0
          %394 = vst.msk [vmem:[#allocation5 + $0x28] sm:$0xff] %vm364, 0.0
          %395 = vst.msk [vmem:[#allocation5 + $0x30] sm:$0xff] %vm364, 0.0
          %396 = vst.msk [vmem:[#allocation5 + $0x38] sm:$0xff] %vm364, 0.0
        $region48: #{tpu_custom_call.1} parent=43 // pred_fallthru
          _
        %v397 = vld [vmem:[%s332] sm:$0xf]
        %v398 = vld [vmem:[%s332 + $0x4] sm:$0xf]
        %v399 = vld [vmem:[%s332 + $0x8] sm:$0xf]
        %v400 = vld [vmem:[%s332 + $0xc] sm:$0xf]
        %v401 = vld [vmem:[%s332 + $0x10] sm:$0xf]
        %v402 = vld [vmem:[%s332 + $0x14] sm:$0xf]
        %v403 = vld [vmem:[%s332 + $0x18] sm:$0xf]
        %v404 = vld [vmem:[%s332 + $0x1c] sm:$0xf]
        %v405 = vld [vmem:[%s338] sm:$0xf]
        %v406 = vld [vmem:[%s338 + $0x4] sm:$0xf]
        %v407 = vld [vmem:[%s338 + $0x8] sm:$0xf]
        %v408 = vld [vmem:[%s338 + $0xc] sm:$0xf]
        %v409 = vld [vmem:[%s338 + $0x10] sm:$0xf]
        %v410 = vld [vmem:[%s338 + $0x14] sm:$0xf]
        %v411 = vld [vmem:[%s338 + $0x18] sm:$0xf]
        %v412 = vld [vmem:[%s338 + $0x1c] sm:$0xf]
        %v413 = vld [vmem:[%s338 + $0x20] sm:$0xf]
        %v414 = vld [vmem:[%s338 + $0x24] sm:$0xf]
        %v415 = vld [vmem:[%s338 + $0x28] sm:$0xf]
        %v416 = vld [vmem:[%s338 + $0x2c] sm:$0xf]
        %v417 = vld [vmem:[%s338 + $0x30] sm:$0xf]
        %v418 = vld [vmem:[%s338 + $0x34] sm:$0xf]
        %v419 = vld [vmem:[%s338 + $0x38] sm:$0xf]
        %v420 = vld [vmem:[%s338 + $0x3c] sm:$0xf]
        %v429 = vunpack.c.l.b16 %v397
        %v430 = vunpack.c.l.b16 %v398
        %v431 = vunpack.c.l.b16 %v399
        %v432 = vunpack.c.l.b16 %v400
        %v433 = vunpack.c.l.b16 %v401
        %v434 = vunpack.c.l.b16 %v402
        %v435 = vunpack.c.l.b16 %v403
        %v436 = vunpack.c.l.b16 %v404
        %v437 = vpack.c.b16 %v430, %v429
        %v438 = vpack.c.b16 %v432, %v431
        %v439 = vpack.c.b16 %v434, %v433
        %v440 = vpack.c.b16 %v436, %v435
        %v457 = vunpack.c.l.b16 %v405
        %v458 = vunpack.c.l.b16 %v406
        %v459 = vunpack.c.l.b16 %v407
        %v460 = vunpack.c.l.b16 %v408
        %v461 = vunpack.c.l.b16 %v409
        %v462 = vunpack.c.l.b16 %v410
        %v463 = vunpack.c.l.b16 %v411
        %v464 = vunpack.c.l.b16 %v412
        %v465 = vunpack.c.l.b16 %v413
        %v466 = vunpack.c.l.b16 %v414
        %v467 = vunpack.c.l.b16 %v415
        %v468 = vunpack.c.l.b16 %v416
        %v469 = vunpack.c.l.b16 %v417
        %v470 = vunpack.c.l.b16 %v418
        %v471 = vunpack.c.l.b16 %v419
        %v472 = vunpack.c.l.b16 %v420
        %v473 = vpack.c.b16 %v458, %v457
        %v474 = vpack.c.b16 %v460, %v459
        %v475 = vpack.c.b16 %v462, %v461
        %v476 = vpack.c.b16 %v464, %v463
        %v477 = vpack.c.b16 %v466, %v465
        %v478 = vpack.c.b16 %v468, %v467
        %v479 = vpack.c.b16 %v470, %v469
        %v480 = vpack.c.b16 %v472, %v471
        %vm481 = vcmask 261120
        %v483 = vsel %vm481, %v437, 0
        %v486 = vsel %vm481, %v438, 0
        %v489 = vsel %vm481, %v439, 0
        %v492 = vsel %vm481, %v440, 0
        %v495 = vsel %vm481, %v473, 0
        %v498 = vsel %vm481, %v474, 0
        %v501 = vsel %vm481, %v475, 0
        %v504 = vsel %vm481, %v476, 0
        %v507 = vsel %vm481, %v477, 0
        %v510 = vsel %vm481, %v478, 0
        %v513 = vsel %vm481, %v479, 0
        %v516 = vsel %vm481, %v480, 0
        %518 = vmatprep.subr.bf16.mxu0 0
        %519 = vmatpush1.bf16.xpose.msra.mxu0 %v495
        %520 = vmatprep.subr.bf16.mxu0 0
        %521 = vmatpush1.bf16.xpose.msra.mxu0 %v498
        %522 = vmatprep.subr.bf16.mxu0 0
        %523 = vmatpush1.bf16.xpose.msra.mxu0 %v501
        %524 = vmatprep.subr.bf16.mxu0 0
        %525 = vmatpush1.bf16.xpose.msra.mxu0 %v504
        %526 = vmatprep.subr.bf16.mxu0 0
        %527 = vmatpush1.bf16.xpose.msra.mxu0 %v507
        %528 = vmatprep.subr.bf16.mxu0 0
        %529 = vmatpush1.bf16.xpose.msra.mxu0 %v510
        %530 = vmatprep.subr.bf16.mxu0 0
        %531 = vmatpush1.bf16.xpose.msra.mxu0 %v513
        %532 = vmatprep.subr.bf16.mxu0 0
        %533 = vmatpush1.bf16.xpose.msra.mxu0 %v516
        %534 = vmatprep.subr.bf16.mxu0 0
        %535 = vmatpush1.bf16.xpose.msra.mxu0 0
        %536 = vmatprep.subr.bf16.mxu0 0
        %537 = vmatpush1.bf16.xpose.msra.mxu0 0
        %538 = vmatprep.subr.bf16.mxu0 0
        %539 = vmatpush1.bf16.xpose.msra.mxu0 0
        %540 = vmatprep.subr.bf16.mxu0 0
        %541 = vmatpush1.bf16.xpose.msra.mxu0 0
        %542 = vmatprep.subr.bf16.mxu0 0
        %543 = vmatpush1.bf16.xpose.msra.mxu0 0
        %544 = vmatprep.subr.bf16.mxu0 0
        %545 = vmatpush1.bf16.xpose.msra.mxu0 0
        %546 = vmatprep.subr.bf16.mxu0 0
        %547 = vmatpush1.bf16.xpose.msra.mxu0 0
        %548 = vmatprep.subr.bf16.mxu0 0
        %549 = vmatpush1.bf16.xpose.msra.mxu0 0
        %550 = vmatprep.mubr.bf16.mxu0 0
        %551 = vmatmul.mubr.bf16.gmra.mrb[0].mxu0 %v483
        %v552 = vpop.f32.mrb[0].mxu0
        %v553 = vadd.f32 0.0, %v552
        %v554 = vpop.f32.mrb[0].mxu0
        %v555 = vpop.f32.mrb[0].mxu0
        %v556 = vadd.f32 0.0, %v555
        %v557 = vpop.f32.mrb[0].mxu0
        %558 = vmatprep.mubr.bf16.mxu0 0
        %559 = vmatmul.mubr.bf16.gmra.mrb[0].mxu0 %v486
        %v560 = vpop.f32.mrb[0].mxu0
        %v561 = vadd.f32 0.0, %v560
        %v562 = vpop.f32.mrb[0].mxu0
        %v563 = vpop.f32.mrb[0].mxu0
        %v564 = vadd.f32 0.0, %v563
        %v565 = vpop.f32.mrb[0].mxu0
        %566 = vmatprep.mubr.bf16.mxu0 0
        %567 = vmatmul.mubr.bf16.gmra.mrb[0].mxu0 %v489
        %v568 = vpop.f32.mrb[0].mxu0
        %v569 = vadd.f32 0.0, %v568
        %v570 = vpop.f32.mrb[0].mxu0
        %v571 = vpop.f32.mrb[0].mxu0
        %v572 = vadd.f32 0.0, %v571
        %v573 = vpop.f32.mrb[0].mxu0
        %574 = vmatprep.mubr.bf16.mxu0 0
        %575 = vmatmul.mubr.bf16.gmra.mrb[0].mxu0 %v492
        %v576 = vpop.f32.mrb[0].mxu0
        %v577 = vadd.f32 0.0, %v576
        %v578 = vpop.f32.mrb[0].mxu0
        %v579 = vpop.f32.mrb[0].mxu0
        %v580 = vadd.f32 0.0, %v579
        %v581 = vpop.f32.mrb[0].mxu0
        %582 = vdwg.mxu0
        %v583 = vld [vmem:[%s344] sm:$0xff]
        %v584 = vld [vmem:[%s344 + $0x8] sm:$0xff]
        %v585 = vld [vmem:[%s344 + $0x10] sm:$0xff]
        %v586 = vld [vmem:[%s344 + $0x18] sm:$0xff]
        %v587 = vld [vmem:[%s344 + $0x20] sm:$0xff]
        %v588 = vld [vmem:[%s344 + $0x28] sm:$0xff]
        %v589 = vld [vmem:[%s344 + $0x30] sm:$0xff]
        %v590 = vld [vmem:[%s344 + $0x38] sm:$0xff]
        %v591 = vld [vmem:[%s348] sm:$0x1]
        %592 = vset.pattern.permute.xlu0 0
        %593 = vperm.xlu0 %592, %v583
        %v594 = vpop.permute.xlu0 %593
        %595 = vset.pattern.permute.xlu0 0
        %596 = vperm.xlu0 %595, %v584
        %v597 = vpop.permute.xlu0 %596
        %598 = vset.pattern.permute.xlu0 0
        %599 = vperm.xlu0 %598, %v585
        %v600 = vpop.permute.xlu0 %599
        %601 = vset.pattern.permute.xlu0 0
        %602 = vperm.xlu0 %601, %v586
        %v603 = vpop.permute.xlu0 %602
        %604 = vset.pattern.permute.xlu0 0
        %605 = vperm.xlu0 %604, %v587
        %v606 = vpop.permute.xlu0 %605
        %607 = vset.pattern.permute.xlu0 0
        %608 = vperm.xlu0 %607, %v588
        %v609 = vpop.permute.xlu0 %608
        %610 = vset.pattern.permute.xlu0 0
        %611 = vperm.xlu0 %610, %v589
        %v612 = vpop.permute.xlu0 %611
        %613 = vset.pattern.permute.xlu0 0
        %614 = vperm.xlu0 %613, %v590
        %v615 = vpop.permute.xlu0 %614
        %v616 = vlaneseq
        %v617 = vshrl.u32 %v616, 7
        %v618 = vsub.s32 0, %v617
        %v619 = vrot.slane %v591, %v618
        %vm620 = vcmp.eq.s32.totalorder %v594, %v619
        %vm621 = vcmp.eq.s32.totalorder %v597, %v619
        %vm622 = vcmp.eq.s32.totalorder %v600, %v619
        %vm623 = vcmp.eq.s32.totalorder %v603, %v619
        %vm624 = vcmp.eq.s32.totalorder %v606, %v619
        %vm625 = vcmp.eq.s32.totalorder %v609, %v619
        %vm626 = vcmp.eq.s32.totalorder %v612, %v619
        %vm627 = vcmp.eq.s32.totalorder %v615, %v619
        %v628 = vld [vmem:[%s353] sm:$0xff]
        %v629 = vld [vmem:[%s353 + $0x8] sm:$0xff]
        %v630 = vld [vmem:[%s353 + $0x10] sm:$0xff]
        %v631 = vld [vmem:[%s353 + $0x18] sm:$0xff]
        %v632 = vld [vmem:[%s353 + $0x20] sm:$0xff]
        %v633 = vld [vmem:[%s353 + $0x28] sm:$0xff]
        %v634 = vld [vmem:[%s353 + $0x30] sm:$0xff]
        %v635 = vld [vmem:[%s353 + $0x38] sm:$0xff]
        %v636 = vld [vmem:[%s357] sm:$0x1]
        %637 = vset.pattern.permute.xlu0 0
        %638 = vperm.xlu0 %637, %v628
        %v639 = vpop.permute.xlu0 %638
        %640 = vset.pattern.permute.xlu0 0
        %641 = vperm.xlu0 %640, %v629
        %v642 = vpop.permute.xlu0 %641
        %643 = vset.pattern.permute.xlu0 0
        %644 = vperm.xlu0 %643, %v630
        %v645 = vpop.permute.xlu0 %644
        %646 = vset.pattern.permute.xlu0 0
        %647 = vperm.xlu0 %646, %v631
        %v648 = vpop.permute.xlu0 %647
        %649 = vset.pattern.permute.xlu0 0
        %650 = vperm.xlu0 %649, %v632
        %v651 = vpop.permute.xlu0 %650
        %652 = vset.pattern.permute.xlu0 0
        %653 = vperm.xlu0 %652, %v633
        %v654 = vpop.permute.xlu0 %653
        %655 = vset.pattern.permute.xlu0 0
        %656 = vperm.xlu0 %655, %v634
        %v657 = vpop.permute.xlu0 %656
        %658 = vset.pattern.permute.xlu0 0
        %659 = vperm.xlu0 %658, %v635
        %v660 = vpop.permute.xlu0 %659
        %v661 = vlaneseq
        %v662 = vshrl.u32 %v661, 7
        %v663 = vsub.s32 0, %v662
        %v664 = vrot.slane %v636, %v663
        %vm665 = vcmp.ne.s32.totalorder %v639, %v664
        %vm666 = vcmp.ne.s32.totalorder %v642, %v664
        %vm667 = vcmp.ne.s32.totalorder %v645, %v664
        %vm668 = vcmp.ne.s32.totalorder %v648, %v664
        %vm669 = vcmp.ne.s32.totalorder %v651, %v664
        %vm670 = vcmp.ne.s32.totalorder %v654, %v664
        %vm671 = vcmp.ne.s32.totalorder %v657, %v664
        %vm672 = vcmp.ne.s32.totalorder %v660, %v664
        %vm673 = vmand %vm620, %vm665
        %vm674 = vmand %vm621, %vm666
        %vm675 = vmand %vm622, %vm667
        %vm676 = vmand %vm623, %vm668
        %vm677 = vmand %vm624, %vm669
        %vm678 = vmand %vm625, %vm670
        %vm679 = vmand %vm626, %vm671
        %vm680 = vmand %vm627, %vm672
        %s681 = smul.u32 %s24, 64
        %s682 = sadd.s32 %s25, 1
        %s683 = smul.u32 %s682, 128
        %p684 = scmp.lt.s32.totalorder %s681, %s683
        %s685 = smul.u32 %s25, 128
        %s686 = sadd.s32 %s24, 1
        %s687 = smul.u32 %s686, 64
        %p688 = scmp.lt.s32.totalorder %s685, %s687
        %p689 = pnand %p684, %p688
        %p690 = pneg %p689
        %p691 = por %p690, %p360
        %v692 = vld [vmem:[#allocation2] sm:$0xff]
        %v693 = vld [vmem:[#allocation2 + $0x8] sm:$0xff]
        %v694 = vld [vmem:[#allocation2 + $0x10] sm:$0xff]
        %v695 = vld [vmem:[#allocation2 + $0x18] sm:$0xff]
        %v696 = vld [vmem:[#allocation2 + $0x20] sm:$0xff]
        %v697 = vld [vmem:[#allocation2 + $0x28] sm:$0xff]
        %v698 = vld [vmem:[#allocation2 + $0x30] sm:$0xff]
        %v699 = vld [vmem:[#allocation2 + $0x38] sm:$0xff]
        // Predicated region
        $region49: #{tpu_custom_call.1} parent=43 // pred_check
          %p700 = pneg %p691
        $region50: #{tpu_custom_call.1} parent=43 // pred_check_branch
          %702 = sbr.rel (%p700) target = $region52
        $region51: #{tpu_custom_call.1} parent=43 // pred_region
          %v703 = vlaneseq
          %v704 = vshrl.u32 %v703, 7
          %v705 = vadd.s32 %v704, 8
          %v706 = vadd.s32 %v704, 16
          %v707 = vadd.s32 %v704, 24
          %v708 = vadd.s32 %v704, 32
          %v709 = vadd.s32 %v704, 40
          %v710 = vadd.s32 %v704, 48
          %v711 = vadd.s32 %v704, 56
          %v712 = vstv %s681
          %v713 = vadd.s32 %v712, %v704
          %v714 = vadd.s32 %v712, %v705
          %v715 = vadd.s32 %v712, %v706
          %v716 = vadd.s32 %v712, %v707
          %v717 = vadd.s32 %v712, %v708
          %v718 = vadd.s32 %v712, %v709
          %v719 = vadd.s32 %v712, %v710
          %v720 = vadd.s32 %v712, %v711
          %v721 = vlaneseq
          %v722 = vand.u32 %v721, 127
          %v723 = vstv %s685
          %v724 = vadd.s32 %v723, %v722
          %vm725 = vcmp.lt.s32.totalorder %v724, 16
          %vm726 = vcmp.ne.s32.totalorder %v713, %v724
          %vm727 = vcmp.ne.s32.totalorder %v714, %v724
          %vm728 = vcmp.ne.s32.totalorder %v715, %v724
          %vm729 = vcmp.ne.s32.totalorder %v716, %v724
          %vm730 = vcmp.ne.s32.totalorder %v717, %v724
          %vm731 = vcmp.ne.s32.totalorder %v718, %v724
          %vm732 = vcmp.ne.s32.totalorder %v719, %v724
          %vm733 = vcmp.ne.s32.totalorder %v720, %v724
          %vm734 = vmand %vm725, %vm726
          %vm735 = vmand %vm725, %vm727
          %vm736 = vmand %vm725, %vm728
          %vm737 = vmand %vm725, %vm729
          %vm738 = vmand %vm725, %vm730
          %vm739 = vmand %vm725, %vm731
          %vm740 = vmand %vm725, %vm732
          %vm741 = vmand %vm725, %vm733
          %vm742 = vmand %vm673, %vm734
          %vm743 = vmand %vm674, %vm735
          %vm744 = vmand %vm675, %vm736
          %vm745 = vmand %vm676, %vm737
          %vm746 = vmand %vm677, %vm738
          %vm747 = vmand %vm678, %vm739
          %vm748 = vmand %vm679, %vm740
          %vm749 = vmand %vm680, %vm741
          %v750 = vsel %vm725, %v553, -1e+30
          %v751 = vsel %vm725, %v556, -1e+30
          %v752 = vsel %vm725, %v561, -1e+30
          %v753 = vsel %vm725, %v564, -1e+30
          %v754 = vsel %vm725, %v569, -1e+30
          %v755 = vsel %vm725, %v572, -1e+30
          %v756 = vsel %vm725, %v577, -1e+30
          %v757 = vsel %vm725, %v580, -1e+30
          %758 = vmax.xlane.f32.xlu0 %v750
          %v759 = vpop.xlane.xlu0 %758
          %760 = vmax.xlane.f32.xlu0 %v751
          %v761 = vpop.xlane.xlu0 %760
          %762 = vmax.xlane.f32.xlu0 %v752
          %v763 = vpop.xlane.xlu0 %762
          %764 = vmax.xlane.f32.xlu0 %v753
          %v765 = vpop.xlane.xlu0 %764
          %766 = vmax.xlane.f32.xlu0 %v754
          %v767 = vpop.xlane.xlu0 %766
          %768 = vmax.xlane.f32.xlu0 %v755
          %v769 = vpop.xlane.xlu0 %768
          %770 = vmax.xlane.f32.xlu0 %v756
          %v771 = vpop.xlane.xlu0 %770
          %772 = vmax.xlane.f32.xlu0 %v757
          %v773 = vpop.xlane.xlu0 %772
          %v774 = vmax.f32 %v692, %v759
          %v775 = vmax.f32 %v693, %v761
          %v776 = vmax.f32 %v694, %v763
          %v777 = vmax.f32 %v695, %v765
          %v778 = vmax.f32 %v696, %v767
          %v779 = vmax.f32 %v697, %v769
          %v780 = vmax.f32 %v698, %v771
          %v781 = vmax.f32 %v699, %v773
          %v782 = vsub.f32 %v692, %v774
          %v783 = vsub.f32 %v693, %v775
          %v784 = vsub.f32 %v694, %v776
          %v785 = vsub.f32 %v695, %v777
          %v786 = vsub.f32 %v696, %v778
          %v787 = vsub.f32 %v697, %v779
          %v788 = vsub.f32 %v698, %v780
          %v789 = vsub.f32 %v699, %v781
          %v790 = vmul.f32 %v782, 1.442695
          %v791 = vpow.pop %v790
          %v792 = vmul.f32 %v783, 1.442695
          %v793 = vpow.pop %v792
          %v794 = vmul.f32 %v784, 1.442695
          %v795 = vpow.pop %v794
          %v796 = vmul.f32 %v785, 1.442695
          %v797 = vpow.pop %v796
          %v798 = vmul.f32 %v786, 1.442695
          %v799 = vpow.pop %v798
          %v800 = vmul.f32 %v787, 1.442695
          %v801 = vpow.pop %v800
          %v802 = vmul.f32 %v788, 1.442695
          %v803 = vpow.pop %v802
          %v804 = vmul.f32 %v789, 1.442695
          %v805 = vpow.pop %v804
          %807 = vset.pattern.permute.xlu0 0
          %808 = vperm.xlu0 %807, %v774
          %v809 = vpop.permute.xlu0 %808
          %812 = vset.pattern.permute.xlu0 0
          %813 = vperm.xlu0 %812, %v775
          %v814 = vpop.permute.xlu0 %813
          %817 = vset.pattern.permute.xlu0 0
          %818 = vperm.xlu0 %817, %v776
          %v819 = vpop.permute.xlu0 %818
          %822 = vset.pattern.permute.xlu0 0
          %823 = vperm.xlu0 %822, %v777
          %v824 = vpop.permute.xlu0 %823
          %827 = vset.pattern.permute.xlu0 0
          %828 = vperm.xlu0 %827, %v778
          %v829 = vpop.permute.xlu0 %828
          %832 = vset.pattern.permute.xlu0 0
          %833 = vperm.xlu0 %832, %v779
          %v834 = vpop.permute.xlu0 %833
          %837 = vset.pattern.permute.xlu0 0
          %838 = vperm.xlu0 %837, %v780
          %v839 = vpop.permute.xlu0 %838
          %842 = vset.pattern.permute.xlu0 0
          %843 = vperm.xlu0 %842, %v781
          %v844 = vpop.permute.xlu0 %843
          %v846 = vsub.f32 %v553, %v809
          %v847 = vsub.f32 %v556, %v814
          %v848 = vsub.f32 %v561, %v819
          %v849 = vsub.f32 %v564, %v824
          %v850 = vsub.f32 %v569, %v829
          %v851 = vsub.f32 %v572, %v834
          %v852 = vsub.f32 %v577, %v839
          %v853 = vsub.f32 %v580, %v844
          %v854 = vmul.f32 %v846, 1.442695
          %v855 = vpow.pop %v854
          %v856 = vmul.f32 %v847, 1.442695
          %v857 = vpow.pop %v856
          %v858 = vmul.f32 %v848, 1.442695
          %v859 = vpow.pop %v858
          %v860 = vmul.f32 %v849, 1.442695
          %v861 = vpow.pop %v860
          %v862 = vmul.f32 %v850, 1.442695
          %v863 = vpow.pop %v862
          %v864 = vmul.f32 %v851, 1.442695
          %v865 = vpow.pop %v864
          %v866 = vmul.f32 %v852, 1.442695
          %v867 = vpow.pop %v866
          %v868 = vmul.f32 %v853, 1.442695
          %v869 = vpow.pop %v868
          %v870 = vsel %vm734, %v855, 0.0
          %v871 = vsel %vm735, %v857, 0.0
          %v872 = vsel %vm736, %v859, 0.0
          %v873 = vsel %vm737, %v861, 0.0
          %v874 = vsel %vm738, %v863, 0.0
          %v875 = vsel %vm739, %v865, 0.0
          %v876 = vsel %vm740, %v867, 0.0
          %v877 = vsel %vm741, %v869, 0.0
          %v878 = vld [vmem:[#allocation3] sm:$0xff]
          %v879 = vld [vmem:[#allocation3 + $0x8] sm:$0xff]
          %v880 = vld [vmem:[#allocation3 + $0x10] sm:$0xff]
          %v881 = vld [vmem:[#allocation3 + $0x18] sm:$0xff]
          %v882 = vld [vmem:[#allocation3 + $0x20] sm:$0xff]
          %v883 = vld [vmem:[#allocation3 + $0x28] sm:$0xff]
          %v884 = vld [vmem:[#allocation3 + $0x30] sm:$0xff]
          %v885 = vld [vmem:[#allocation3 + $0x38] sm:$0xff]
          %v886 = vmul.f32 %v791, %v878
          %v887 = vmul.f32 %v793, %v879
          %v888 = vmul.f32 %v795, %v880
          %v889 = vmul.f32 %v797, %v881
          %v890 = vmul.f32 %v799, %v882
          %v891 = vmul.f32 %v801, %v883
          %v892 = vmul.f32 %v803, %v884
          %v893 = vmul.f32 %v805, %v885
          %894 = vadd.xlane.f32.xlu0 %v870
          %v895 = vpop.xlane.xlu0 %894
          %896 = vadd.xlane.f32.xlu0 %v871
          %v897 = vpop.xlane.xlu0 %896
          %898 = vadd.xlane.f32.xlu0 %v872
          %v899 = vpop.xlane.xlu0 %898
          %900 = vadd.xlane.f32.xlu0 %v873
          %v901 = vpop.xlane.xlu0 %900
          %902 = vadd.xlane.f32.xlu0 %v874
          %v903 = vpop.xlane.xlu0 %902
          %904 = vadd.xlane.f32.xlu0 %v875
          %v905 = vpop.xlane.xlu0 %904
          %906 = vadd.xlane.f32.xlu0 %v876
          %v907 = vpop.xlane.xlu0 %906
          %908 = vadd.xlane.f32.xlu0 %v877
          %v909 = vpop.xlane.xlu0 %908
          %v910 = vadd.f32 %v886, %v895
          %v911 = vadd.f32 %v887, %v897
          %v912 = vadd.f32 %v888, %v899
          %v913 = vadd.f32 %v889, %v901
          %v914 = vadd.f32 %v890, %v903
          %v915 = vadd.f32 %v891, %v905
          %v916 = vadd.f32 %v892, %v907
          %v917 = vadd.f32 %v893, %v909
          %vm918 = vcmask 7168
          %919 = vst.msk [vmem:[#allocation3] sm:$0xff] %vm918, %v910
          %920 = vst.msk [vmem:[#allocation3 + $0x8] sm:$0xff] %vm918, %v911
          %921 = vst.msk [vmem:[#allocation3 + $0x10] sm:$0xff] %vm918, %v912
          %922 = vst.msk [vmem:[#allocation3 + $0x18] sm:$0xff] %vm918, %v913
          %923 = vst.msk [vmem:[#allocation3 + $0x20] sm:$0xff] %vm918, %v914
          %924 = vst.msk [vmem:[#allocation3 + $0x28] sm:$0xff] %vm918, %v915
          %925 = vst.msk [vmem:[#allocation3 + $0x30] sm:$0xff] %vm918, %v916
          %926 = vst.msk [vmem:[#allocation3 + $0x38] sm:$0xff] %vm918, %v917
          %927 = vst.msk [vmem:[#allocation2] sm:$0xff] %vm918, %v774
          %928 = vst.msk [vmem:[#allocation2 + $0x8] sm:$0xff] %vm918, %v775
          %929 = vst.msk [vmem:[#allocation2 + $0x10] sm:$0xff] %vm918, %v776
          %930 = vst.msk [vmem:[#allocation2 + $0x18] sm:$0xff] %vm918, %v777
          %931 = vst.msk [vmem:[#allocation2 + $0x20] sm:$0xff] %vm918, %v778
          %932 = vst.msk [vmem:[#allocation2 + $0x28] sm:$0xff] %vm918, %v779
          %933 = vst.msk [vmem:[#allocation2 + $0x30] sm:$0xff] %vm918, %v780
          %934 = vst.msk [vmem:[#allocation2 + $0x38] sm:$0xff] %vm918, %v781
          %v935 = vld [vmem:[#allocation4] sm:$0xff]
          %v936 = vld [vmem:[#allocation4 + $0x8] sm:$0xff]
          %v937 = vld [vmem:[#allocation4 + $0x10] sm:$0xff]
          %v938 = vld [vmem:[#allocation4 + $0x18] sm:$0xff]
          %v939 = vld [vmem:[#allocation4 + $0x20] sm:$0xff]
          %v940 = vld [vmem:[#allocation4 + $0x28] sm:$0xff]
          %v941 = vld [vmem:[#allocation4 + $0x30] sm:$0xff]
          %v942 = vld [vmem:[#allocation4 + $0x38] sm:$0xff]
          %v943 = vsel %vm742, %v553, 0.0
          %v944 = vsel %vm743, %v556, 0.0
          %v945 = vsel %vm744, %v561, 0.0
          %v946 = vsel %vm745, %v564, 0.0
          %v947 = vsel %vm746, %v569, 0.0
          %v948 = vsel %vm747, %v572, 0.0
          %v949 = vsel %vm748, %v577, 0.0
          %v950 = vsel %vm749, %v580, 0.0
          %951 = vadd.xlane.f32.xlu0 %v943
          %v952 = vpop.xlane.xlu0 %951
          %953 = vadd.xlane.f32.xlu0 %v944
          %v954 = vpop.xlane.xlu0 %953
          %955 = vadd.xlane.f32.xlu0 %v945
          %v956 = vpop.xlane.xlu0 %955
          %957 = vadd.xlane.f32.xlu0 %v946
          %v958 = vpop.xlane.xlu0 %957
          %959 = vadd.xlane.f32.xlu0 %v947
          %v960 = vpop.xlane.xlu0 %959
          %961 = vadd.xlane.f32.xlu0 %v948
          %v962 = vpop.xlane.xlu0 %961
          %963 = vadd.xlane.f32.xlu0 %v949
          %v964 = vpop.xlane.xlu0 %963
          %965 = vadd.xlane.f32.xlu0 %v950
          %v966 = vpop.xlane.xlu0 %965
          %v967 = vadd.f32 %v935, %v952
          %v968 = vadd.f32 %v936, %v954
          %v969 = vadd.f32 %v937, %v956
          %v970 = vadd.f32 %v938, %v958
          %v971 = vadd.f32 %v939, %v960
          %v972 = vadd.f32 %v940, %v962
          %v973 = vadd.f32 %v941, %v964
          %v974 = vadd.f32 %v942, %v966
          %975 = vst.msk [vmem:[#allocation4] sm:$0xff] %vm918, %v967
          %976 = vst.msk [vmem:[#allocation4 + $0x8] sm:$0xff] %vm918, %v968
          %977 = vst.msk [vmem:[#allocation4 + $0x10] sm:$0xff] %vm918, %v969
          %978 = vst.msk [vmem:[#allocation4 + $0x18] sm:$0xff] %vm918, %v970
          %979 = vst.msk [vmem:[#allocation4 + $0x20] sm:$0xff] %vm918, %v971
          %980 = vst.msk [vmem:[#allocation4 + $0x28] sm:$0xff] %vm918, %v972
          %981 = vst.msk [vmem:[#allocation4 + $0x30] sm:$0xff] %vm918, %v973
          %982 = vst.msk [vmem:[#allocation4 + $0x38] sm:$0xff] %vm918, %v974
          %v983 = vld [vmem:[#allocation5] sm:$0xff]
          %v984 = vld [vmem:[#allocation5 + $0x8] sm:$0xff]
          %v985 = vld [vmem:[#allocation5 + $0x10] sm:$0xff]
          %v986 = vld [vmem:[#allocation5 + $0x18] sm:$0xff]
          %v987 = vld [vmem:[#allocation5 + $0x20] sm:$0xff]
          %v988 = vld [vmem:[#allocation5 + $0x28] sm:$0xff]
          %v989 = vld [vmem:[#allocation5 + $0x30] sm:$0xff]
          %v990 = vld [vmem:[#allocation5 + $0x38] sm:$0xff]
          %v991 = vsel %vm742, 1, 0
          %v992 = vsel %vm743, 1, 0
          %v993 = vsel %vm744, 1, 0
          %v994 = vsel %vm745, 1, 0
          %v995 = vsel %vm746, 1, 0
          %v996 = vsel %vm747, 1, 0
          %v997 = vsel %vm748, 1, 0
          %v998 = vsel %vm749, 1, 0
          %v999 = vcvt.s32.f32 %v991
          %v1000 = vcvt.s32.f32 %v992
          %v1001 = vcvt.s32.f32 %v993
          %v1002 = vcvt.s32.f32 %v994
          %v1003 = vcvt.s32.f32 %v995
          %v1004 = vcvt.s32.f32 %v996
          %v1005 = vcvt.s32.f32 %v997
          %v1006 = vcvt.s32.f32 %v998
          %1007 = vadd.xlane.f32.xlu0 %v999
          %v1008 = vpop.xlane.xlu0 %1007
          %1009 = vadd.xlane.f32.xlu0 %v1000
          %v1010 = vpop.xlane.xlu0 %1009
          %1011 = vadd.xlane.f32.xlu0 %v1001
          %v1012 = vpop.xlane.xlu0 %1011
          %1013 = vadd.xlane.f32.xlu0 %v1002
          %v1014 = vpop.xlane.xlu0 %1013
          %1015 = vadd.xlane.f32.xlu0 %v1003
          %v1016 = vpop.xlane.xlu0 %1015
          %1017 = vadd.xlane.f32.xlu0 %v1004
          %v1018 = vpop.xlane.xlu0 %1017
          %1019 = vadd.xlane.f32.xlu0 %v1005
          %v1020 = vpop.xlane.xlu0 %1019
          %1021 = vadd.xlane.f32.xlu0 %v1006
          %v1022 = vpop.xlane.xlu0 %1021
          %v1023 = vadd.f32 %v983, %v1008
          %v1024 = vadd.f32 %v984, %v1010
          %v1025 = vadd.f32 %v985, %v1012
          %v1026 = vadd.f32 %v986, %v1014
          %v1027 = vadd.f32 %v987, %v1016
          %v1028 = vadd.f32 %v988, %v1018
          %v1029 = vadd.f32 %v989, %v1020
          %v1030 = vadd.f32 %v990, %v1022
          %1031 = vst.msk [vmem:[#allocation5] sm:$0xff] %vm918, %v1023
          %1032 = vst.msk [vmem:[#allocation5 + $0x8] sm:$0xff] %vm918, %v1024
          %1033 = vst.msk [vmem:[#allocation5 + $0x10] sm:$0xff] %vm918, %v1025
          %1034 = vst.msk [vmem:[#allocation5 + $0x18] sm:$0xff] %vm918, %v1026
          %1035 = vst.msk [vmem:[#allocation5 + $0x20] sm:$0xff] %vm918, %v1027
          %1036 = vst.msk [vmem:[#allocation5 + $0x28] sm:$0xff] %vm918, %v1028
          %1037 = vst.msk [vmem:[#allocation5 + $0x30] sm:$0xff] %vm918, %v1029
          %1038 = vst.msk [vmem:[#allocation5 + $0x38] sm:$0xff] %vm918, %v1030
        $region52: #{tpu_custom_call.1} parent=43 // pred_fallthru
          _
        %p1039 = pneg %p691
        // Predicated region
        $region53: #{tpu_custom_call.1} parent=43 // pred_check
          _
        $region54: #{tpu_custom_call.1} parent=43 // pred_check_branch
          %1041 = sbr.rel (%p691) target = $region56
        $region55: #{tpu_custom_call.1} parent=43 // pred_region
          %1042 = vmax.xlane.f32.xlu0 %v553
          %v1043 = vpop.xlane.xlu0 %1042
          %1044 = vmax.xlane.f32.xlu0 %v556
          %v1045 = vpop.xlane.xlu0 %1044
          %1046 = vmax.xlane.f32.xlu0 %v561
          %v1047 = vpop.xlane.xlu0 %1046
          %1048 = vmax.xlane.f32.xlu0 %v564
          %v1049 = vpop.xlane.xlu0 %1048
          %1050 = vmax.xlane.f32.xlu0 %v569
          %v1051 = vpop.xlane.xlu0 %1050
          %1052 = vmax.xlane.f32.xlu0 %v572
          %v1053 = vpop.xlane.xlu0 %1052
          %1054 = vmax.xlane.f32.xlu0 %v577
          %v1055 = vpop.xlane.xlu0 %1054
          %1056 = vmax.xlane.f32.xlu0 %v580
          %v1057 = vpop.xlane.xlu0 %1056
          %v1058 = vmax.f32 %v692, %v1043
          %v1059 = vmax.f32 %v693, %v1045
          %v1060 = vmax.f32 %v694, %v1047
          %v1061 = vmax.f32 %v695, %v1049
          %v1062 = vmax.f32 %v696, %v1051
          %v1063 = vmax.f32 %v697, %v1053
          %v1064 = vmax.f32 %v698, %v1055
          %v1065 = vmax.f32 %v699, %v1057
          %v1066 = vsub.f32 %v692, %v1058
          %v1067 = vsub.f32 %v693, %v1059
          %v1068 = vsub.f32 %v694, %v1060
          %v1069 = vsub.f32 %v695, %v1061
          %v1070 = vsub.f32 %v696, %v1062
          %v1071 = vsub.f32 %v697, %v1063
          %v1072 = vsub.f32 %v698, %v1064
          %v1073 = vsub.f32 %v699, %v1065
          %v1074 = vmul.f32 %v1066, 1.442695
          %v1075 = vpow.pop %v1074
          %v1076 = vmul.f32 %v1067, 1.442695
          %v1077 = vpow.pop %v1076
          %v1078 = vmul.f32 %v1068, 1.442695
          %v1079 = vpow.pop %v1078
          %v1080 = vmul.f32 %v1069, 1.442695
          %v1081 = vpow.pop %v1080
          %v1082 = vmul.f32 %v1070, 1.442695
          %v1083 = vpow.pop %v1082
          %v1084 = vmul.f32 %v1071, 1.442695
          %v1085 = vpow.pop %v1084
          %v1086 = vmul.f32 %v1072, 1.442695
          %v1087 = vpow.pop %v1086
          %v1088 = vmul.f32 %v1073, 1.442695
          %v1089 = vpow.pop %v1088
          %1091 = vset.pattern.permute.xlu0 0
          %1092 = vperm.xlu0 %1091, %v1058
          %v1093 = vpop.permute.xlu0 %1092
          %1096 = vset.pattern.permute.xlu0 0
          %1097 = vperm.xlu0 %1096, %v1059
          %v1098 = vpop.permute.xlu0 %1097
          %1101 = vset.pattern.permute.xlu0 0
          %1102 = vperm.xlu0 %1101, %v1060
          %v1103 = vpop.permute.xlu0 %1102
          %1106 = vset.pattern.permute.xlu0 0
          %1107 = vperm.xlu0 %1106, %v1061
          %v1108 = vpop.permute.xlu0 %1107
          %1111 = vset.pattern.permute.xlu0 0
          %1112 = vperm.xlu0 %1111, %v1062
          %v1113 = vpop.permute.xlu0 %1112
          %1116 = vset.pattern.permute.xlu0 0
          %1117 = vperm.xlu0 %1116, %v1063
          %v1118 = vpop.permute.xlu0 %1117
          %1121 = vset.pattern.permute.xlu0 0
          %1122 = vperm.xlu0 %1121, %v1064
          %v1123 = vpop.permute.xlu0 %1122
          %1126 = vset.pattern.permute.xlu0 0
          %1127 = vperm.xlu0 %1126, %v1065
          %v1128 = vpop.permute.xlu0 %1127
          %v1130 = vsub.f32 %v553, %v1093
          %v1131 = vsub.f32 %v556, %v1098
          %v1132 = vsub.f32 %v561, %v1103
          %v1133 = vsub.f32 %v564, %v1108
          %v1134 = vsub.f32 %v569, %v1113
          %v1135 = vsub.f32 %v572, %v1118
          %v1136 = vsub.f32 %v577, %v1123
          %v1137 = vsub.f32 %v580, %v1128
          %v1138 = vmul.f32 %v1130, 1.442695
          %v1139 = vpow.pop %v1138
          %v1140 = vmul.f32 %v1131, 1.442695
          %v1141 = vpow.pop %v1140
          %v1142 = vmul.f32 %v1132, 1.442695
          %v1143 = vpow.pop %v1142
          %v1144 = vmul.f32 %v1133, 1.442695
          %v1145 = vpow.pop %v1144
          %v1146 = vmul.f32 %v1134, 1.442695
          %v1147 = vpow.pop %v1146
          %v1148 = vmul.f32 %v1135, 1.442695
          %v1149 = vpow.pop %v1148
          %v1150 = vmul.f32 %v1136, 1.442695
          %v1151 = vpow.pop %v1150
          %v1152 = vmul.f32 %v1137, 1.442695
          %v1153 = vpow.pop %v1152
          %v1154 = vld [vmem:[#allocation3] sm:$0xff]
          %v1155 = vld [vmem:[#allocation3 + $0x8] sm:$0xff]
          %v1156 = vld [vmem:[#allocation3 + $0x10] sm:$0xff]
          %v1157 = vld [vmem:[#allocation3 + $0x18] sm:$0xff]
          %v1158 = vld [vmem:[#allocation3 + $0x20] sm:$0xff]
          %v1159 = vld [vmem:[#allocation3 + $0x28] sm:$0xff]
          %v1160 = vld [vmem:[#allocation3 + $0x30] sm:$0xff]
          %v1161 = vld [vmem:[#allocation3 + $0x38] sm:$0xff]
          %v1162 = vmul.f32 %v1075, %v1154
          %v1163 = vmul.f32 %v1077, %v1155
          %v1164 = vmul.f32 %v1079, %v1156
          %v1165 = vmul.f32 %v1081, %v1157
          %v1166 = vmul.f32 %v1083, %v1158
          %v1167 = vmul.f32 %v1085, %v1159
          %v1168 = vmul.f32 %v1087, %v1160
          %v1169 = vmul.f32 %v1089, %v1161
          %1170 = vadd.xlane.f32.xlu0 %v1139
          %v1171 = vpop.xlane.xlu0 %1170
          %1172 = vadd.xlane.f32.xlu0 %v1141
          %v1173 = vpop.xlane.xlu0 %1172
          %1174 = vadd.xlane.f32.xlu0 %v1143
          %v1175 = vpop.xlane.xlu0 %1174
          %1176 = vadd.xlane.f32.xlu0 %v1145
          %v1177 = vpop.xlane.xlu0 %1176
          %1178 = vadd.xlane.f32.xlu0 %v1147
          %v1179 = vpop.xlane.xlu0 %1178
          %1180 = vadd.xlane.f32.xlu0 %v1149
          %v1181 = vpop.xlane.xlu0 %1180
          %1182 = vadd.xlane.f32.xlu0 %v1151
          %v1183 = vpop.xlane.xlu0 %1182
          %1184 = vadd.xlane.f32.xlu0 %v1153
          %v1185 = vpop.xlane.xlu0 %1184
          %v1186 = vadd.f32 %v1162, %v1171
          %v1187 = vadd.f32 %v1163, %v1173
          %v1188 = vadd.f32 %v1164, %v1175
          %v1189 = vadd.f32 %v1165, %v1177
          %v1190 = vadd.f32 %v1166, %v1179
          %v1191 = vadd.f32 %v1167, %v1181
          %v1192 = vadd.f32 %v1168, %v1183
          %v1193 = vadd.f32 %v1169, %v1185
          %vm1194 = vcmask 7168
          %1195 = vst.msk [vmem:[#allocation3] sm:$0xff] %vm1194, %v1186
          %1196 = vst.msk [vmem:[#allocation3 + $0x8] sm:$0xff] %vm1194, %v1187
          %1197 = vst.msk [vmem:[#allocation3 + $0x10] sm:$0xff] %vm1194, %v1188
          %1198 = vst.msk [vmem:[#allocation3 + $0x18] sm:$0xff] %vm1194, %v1189
          %1199 = vst.msk [vmem:[#allocation3 + $0x20] sm:$0xff] %vm1194, %v1190
          %1200 = vst.msk [vmem:[#allocation3 + $0x28] sm:$0xff] %vm1194, %v1191
          %1201 = vst.msk [vmem:[#allocation3 + $0x30] sm:$0xff] %vm1194, %v1192
          %1202 = vst.msk [vmem:[#allocation3 + $0x38] sm:$0xff] %vm1194, %v1193
          %1203 = vst.msk [vmem:[#allocation2] sm:$0xff] %vm1194, %v1058
          %1204 = vst.msk [vmem:[#allocation2 + $0x8] sm:$0xff] %vm1194, %v1059
          %1205 = vst.msk [vmem:[#allocation2 + $0x10] sm:$0xff] %vm1194, %v1060
          %1206 = vst.msk [vmem:[#allocation2 + $0x18] sm:$0xff] %vm1194, %v1061
          %1207 = vst.msk [vmem:[#allocation2 + $0x20] sm:$0xff] %vm1194, %v1062
          %1208 = vst.msk [vmem:[#allocation2 + $0x28] sm:$0xff] %vm1194, %v1063
          %1209 = vst.msk [vmem:[#allocation2 + $0x30] sm:$0xff] %vm1194, %v1064
          %1210 = vst.msk [vmem:[#allocation2 + $0x38] sm:$0xff] %vm1194, %v1065
          %v1211 = vld [vmem:[#allocation4] sm:$0xff]
          %v1212 = vld [vmem:[#allocation4 + $0x8] sm:$0xff]
          %v1213 = vld [vmem:[#allocation4 + $0x10] sm:$0xff]
          %v1214 = vld [vmem:[#allocation4 + $0x18] sm:$0xff]
          %v1215 = vld [vmem:[#allocation4 + $0x20] sm:$0xff]
          %v1216 = vld [vmem:[#allocation4 + $0x28] sm:$0xff]
          %v1217 = vld [vmem:[#allocation4 + $0x30] sm:$0xff]
          %v1218 = vld [vmem:[#allocation4 + $0x38] sm:$0xff]
          %v1219 = vsel %vm673, %v553, 0.0
          %v1220 = vsel %vm674, %v556, 0.0
          %v1221 = vsel %vm675, %v561, 0.0
          %v1222 = vsel %vm676, %v564, 0.0
          %v1223 = vsel %vm677, %v569, 0.0
          %v1224 = vsel %vm678, %v572, 0.0
          %v1225 = vsel %vm679, %v577, 0.0
          %v1226 = vsel %vm680, %v580, 0.0
          %1227 = vadd.xlane.f32.xlu0 %v1219
          %v1228 = vpop.xlane.xlu0 %1227
          %1229 = vadd.xlane.f32.xlu0 %v1220
          %v1230 = vpop.xlane.xlu0 %1229
          %1231 = vadd.xlane.f32.xlu0 %v1221
          %v1232 = vpop.xlane.xlu0 %1231
          %1233 = vadd.xlane.f32.xlu0 %v1222
          %v1234 = vpop.xlane.xlu0 %1233
          %1235 = vadd.xlane.f32.xlu0 %v1223
          %v1236 = vpop.xlane.xlu0 %1235
          %1237 = vadd.xlane.f32.xlu0 %v1224
          %v1238 = vpop.xlane.xlu0 %1237
          %1239 = vadd.xlane.f32.xlu0 %v1225
          %v1240 = vpop.xlane.xlu0 %1239
          %1241 = vadd.xlane.f32.xlu0 %v1226
          %v1242 = vpop.xlane.xlu0 %1241
          %v1243 = vadd.f32 %v1211, %v1228
          %v1244 = vadd.f32 %v1212, %v1230
          %v1245 = vadd.f32 %v1213, %v1232
          %v1246 = vadd.f32 %v1214, %v1234
          %v1247 = vadd.f32 %v1215, %v1236
          %v1248 = vadd.f32 %v1216, %v1238
          %v1249 = vadd.f32 %v1217, %v1240
          %v1250 = vadd.f32 %v1218, %v1242
          %1251 = vst.msk [vmem:[#allocation4] sm:$0xff] %vm1194, %v1243
          %1252 = vst.msk [vmem:[#allocation4 + $0x8] sm:$0xff] %vm1194, %v1244
          %1253 = vst.msk [vmem:[#allocation4 + $0x10] sm:$0xff] %vm1194, %v1245
          %1254 = vst.msk [vmem:[#allocation4 + $0x18] sm:$0xff] %vm1194, %v1246
          %1255 = vst.msk [vmem:[#allocation4 + $0x20] sm:$0xff] %vm1194, %v1247
          %1256 = vst.msk [vmem:[#allocation4 + $0x28] sm:$0xff] %vm1194, %v1248
          %1257 = vst.msk [vmem:[#allocation4 + $0x30] sm:$0xff] %vm1194, %v1249
          %1258 = vst.msk [vmem:[#allocation4 + $0x38] sm:$0xff] %vm1194, %v1250
          %v1259 = vld [vmem:[#allocation5] sm:$0xff]
          %v1260 = vld [vmem:[#allocation5 + $0x8] sm:$0xff]
          %v1261 = vld [vmem:[#allocation5 + $0x10] sm:$0xff]
          %v1262 = vld [vmem:[#allocation5 + $0x18] sm:$0xff]
          %v1263 = vld [vmem:[#allocation5 + $0x20] sm:$0xff]
          %v1264 = vld [vmem:[#allocation5 + $0x28] sm:$0xff]
          %v1265 = vld [vmem:[#allocation5 + $0x30] sm:$0xff]
          %v1266 = vld [vmem:[#allocation5 + $0x38] sm:$0xff]
          %v1267 = vsel %vm673, 1, 0
          %v1268 = vsel %vm674, 1, 0
          %v1269 = vsel %vm675, 1, 0
          %v1270 = vsel %vm676, 1, 0
          %v1271 = vsel %vm677, 1, 0
          %v1272 = vsel %vm678, 1, 0
          %v1273 = vsel %vm679, 1, 0
          %v1274 = vsel %vm680, 1, 0
          %v1275 = vcvt.s32.f32 %v1267
          %v1276 = vcvt.s32.f32 %v1268
          %v1277 = vcvt.s32.f32 %v1269
          %v1278 = vcvt.s32.f32 %v1270
          %v1279 = vcvt.s32.f32 %v1271
          %v1280 = vcvt.s32.f32 %v1272
          %v1281 = vcvt.s32.f32 %v1273
          %v1282 = vcvt.s32.f32 %v1274
          %1283 = vadd.xlane.f32.xlu0 %v1275
          %v1284 = vpop.xlane.xlu0 %1283
          %1285 = vadd.xlane.f32.xlu0 %v1276
          %v1286 = vpop.xlane.xlu0 %1285
          %1287 = vadd.xlane.f32.xlu0 %v1277
          %v1288 = vpop.xlane.xlu0 %1287
          %1289 = vadd.xlane.f32.xlu0 %v1278
          %v1290 = vpop.xlane.xlu0 %1289
          %1291 = vadd.xlane.f32.xlu0 %v1279
          %v1292 = vpop.xlane.xlu0 %1291
          %1293 = vadd.xlane.f32.xlu0 %v1280
          %v1294 = vpop.xlane.xlu0 %1293
          %1295 = vadd.xlane.f32.xlu0 %v1281
          %v1296 = vpop.xlane.xlu0 %1295
          %1297 = vadd.xlane.f32.xlu0 %v1282
          %v1298 = vpop.xlane.xlu0 %1297
          %v1299 = vadd.f32 %v1259, %v1284
          %v1300 = vadd.f32 %v1260, %v1286
          %v1301 = vadd.f32 %v1261, %v1288
          %v1302 = vadd.f32 %v1262, %v1290
          %v1303 = vadd.f32 %v1263, %v1292
          %v1304 = vadd.f32 %v1264, %v1294
          %v1305 = vadd.f32 %v1265, %v1296
          %v1306 = vadd.f32 %v1266, %v1298
          %1307 = vst.msk [vmem:[#allocation5] sm:$0xff] %vm1194, %v1299
          %1308 = vst.msk [vmem:[#allocation5 + $0x8] sm:$0xff] %vm1194, %v1300
          %1309 = vst.msk [vmem:[#allocation5 + $0x10] sm:$0xff] %vm1194, %v1301
          %1310 = vst.msk [vmem:[#allocation5 + $0x18] sm:$0xff] %vm1194, %v1302
          %1311 = vst.msk [vmem:[#allocation5 + $0x20] sm:$0xff] %vm1194, %v1303
          %1312 = vst.msk [vmem:[#allocation5 + $0x28] sm:$0xff] %vm1194, %v1304
          %1313 = vst.msk [vmem:[#allocation5 + $0x30] sm:$0xff] %vm1194, %v1305
          %1314 = vst.msk [vmem:[#allocation5 + $0x38] sm:$0xff] %vm1194, %v1306
        $region56: #{tpu_custom_call.1} parent=43 // pred_fallthru
          _
        // Predicated region
        $region57: #{tpu_custom_call.1} parent=43 // pred_check
          %p1315 = pneg %p360
        $region58: #{tpu_custom_call.1} parent=43 // pred_check_branch
          %1317 = sbr.rel (%p1315) target = $region60
        $region59: #{tpu_custom_call.1} parent=43 // pred_region
          %v1318 = vld [vmem:[#allocation5] sm:$0xff]
          %v1319 = vld [vmem:[#allocation5 + $0x8] sm:$0xff]
          %v1320 = vld [vmem:[#allocation5 + $0x10] sm:$0xff]
          %v1321 = vld [vmem:[#allocation5 + $0x18] sm:$0xff]
          %v1322 = vld [vmem:[#allocation5 + $0x20] sm:$0xff]
          %v1323 = vld [vmem:[#allocation5 + $0x28] sm:$0xff]
          %v1324 = vld [vmem:[#allocation5 + $0x30] sm:$0xff]
          %v1325 = vld [vmem:[#allocation5 + $0x38] sm:$0xff]
          %vm1326 = vcmp.gt.f32.partialorder %v1318, 0.0
          %vm1327 = vcmp.gt.f32.partialorder %v1319, 0.0
          %vm1328 = vcmp.gt.f32.partialorder %v1320, 0.0
          %vm1329 = vcmp.gt.f32.partialorder %v1321, 0.0
          %vm1330 = vcmp.gt.f32.partialorder %v1322, 0.0
          %vm1331 = vcmp.gt.f32.partialorder %v1323, 0.0
          %vm1332 = vcmp.gt.f32.partialorder %v1324, 0.0
          %vm1333 = vcmp.gt.f32.partialorder %v1325, 0.0
          %v1334 = vld [vmem:[#allocation4] sm:$0xff]
          %v1335 = vld [vmem:[#allocation4 + $0x8] sm:$0xff]
          %v1336 = vld [vmem:[#allocation4 + $0x10] sm:$0xff]
          %v1337 = vld [vmem:[#allocation4 + $0x18] sm:$0xff]
          %v1338 = vld [vmem:[#allocation4 + $0x20] sm:$0xff]
          %v1339 = vld [vmem:[#allocation4 + $0x28] sm:$0xff]
          %v1340 = vld [vmem:[#allocation4 + $0x30] sm:$0xff]
          %v1341 = vld [vmem:[#allocation4 + $0x38] sm:$0xff]
          %v1342 = vsel %vm1326, %v1318, 1.0
          %v1343 = vsel %vm1327, %v1319, 1.0
          %v1344 = vsel %vm1328, %v1320, 1.0
          %v1345 = vsel %vm1329, %v1321, 1.0
          %v1346 = vsel %vm1330, %v1322, 1.0
          %v1347 = vsel %vm1331, %v1323, 1.0
          %v1348 = vsel %vm1332, %v1324, 1.0
          %v1349 = vsel %vm1333, %v1325, 1.0
          %v1350 = vrcp.pop %v1342
          %v1351 = vmul.f32 %v1334, %v1350
          %v1352 = vrcp.pop %v1343
          %v1353 = vmul.f32 %v1335, %v1352
          %v1354 = vrcp.pop %v1344
          %v1355 = vmul.f32 %v1336, %v1354
          %v1356 = vrcp.pop %v1345
          %v1357 = vmul.f32 %v1337, %v1356
          %v1358 = vrcp.pop %v1346
          %v1359 = vmul.f32 %v1338, %v1358
          %v1360 = vrcp.pop %v1347
          %v1361 = vmul.f32 %v1339, %v1360
          %v1362 = vrcp.pop %v1348
          %v1363 = vmul.f32 %v1340, %v1362
          %v1364 = vrcp.pop %v1349
          %v1365 = vmul.f32 %v1341, %v1364
          %v1366 = vld [vmem:[#allocation2] sm:$0xff]
          %v1367 = vld [vmem:[#allocation2 + $0x8] sm:$0xff]
          %v1368 = vld [vmem:[#allocation2 + $0x10] sm:$0xff]
          %v1369 = vld [vmem:[#allocation2 + $0x18] sm:$0xff]
          %v1370 = vld [vmem:[#allocation2 + $0x20] sm:$0xff]
          %v1371 = vld [vmem:[#allocation2 + $0x28] sm:$0xff]
          %v1372 = vld [vmem:[#allocation2 + $0x30] sm:$0xff]
          %v1373 = vld [vmem:[#allocation2 + $0x38] sm:$0xff]
          %v1374 = vsub.f32 %v1351, %v1366
          %v1375 = vsub.f32 %v1353, %v1367
          %v1376 = vsub.f32 %v1355, %v1368
          %v1377 = vsub.f32 %v1357, %v1369
          %v1378 = vsub.f32 %v1359, %v1370
          %v1379 = vsub.f32 %v1361, %v1371
          %v1380 = vsub.f32 %v1363, %v1372
          %v1381 = vsub.f32 %v1365, %v1373
          %v1382 = vld [vmem:[#allocation3] sm:$0xff]
          %v1383 = vld [vmem:[#allocation3 + $0x8] sm:$0xff]
          %v1384 = vld [vmem:[#allocation3 + $0x10] sm:$0xff]
          %v1385 = vld [vmem:[#allocation3 + $0x18] sm:$0xff]
          %v1386 = vld [vmem:[#allocation3 + $0x20] sm:$0xff]
          %v1387 = vld [vmem:[#allocation3 + $0x28] sm:$0xff]
          %v1388 = vld [vmem:[#allocation3 + $0x30] sm:$0xff]
          %v1389 = vld [vmem:[#allocation3 + $0x38] sm:$0xff]
          %v1390 = vadd.f32 %v1382, 1e-09
          %v1391 = vadd.f32 %v1383, 1e-09
          %v1392 = vadd.f32 %v1384, 1e-09
          %v1393 = vadd.f32 %v1385, 1e-09
          %v1394 = vadd.f32 %v1386, 1e-09
          %v1395 = vadd.f32 %v1387, 1e-09
          %v1396 = vadd.f32 %v1388, 1e-09
          %v1397 = vadd.f32 %v1389, 1e-09
          %v1398 = vlog2.pop %v1390
          %v1399 = vmul.f32 %v1398, 0.6931472
          %v1400 = vlog2.pop %v1391
          %v1401 = vmul.f32 %v1400, 0.6931472
          %v1402 = vlog2.pop %v1392
          %v1403 = vmul.f32 %v1402, 0.6931472
          %v1404 = vlog2.pop %v1393
          %v1405 = vmul.f32 %v1404, 0.6931472
          %v1406 = vlog2.pop %v1394
          %v1407 = vmul.f32 %v1406, 0.6931472
          %v1408 = vlog2.pop %v1395
          %v1409 = vmul.f32 %v1408, 0.6931472
          %v1410 = vlog2.pop %v1396
          %v1411 = vmul.f32 %v1410, 0.6931472
          %v1412 = vlog2.pop %v1397
          %v1413 = vmul.f32 %v1412, 0.6931472
          %v1414 = vsub.f32 %v1374, %v1399
          %v1415 = vsub.f32 %v1375, %v1401
          %v1416 = vsub.f32 %v1376, %v1403
          %v1417 = vsub.f32 %v1377, %v1405
          %v1418 = vsub.f32 %v1378, %v1407
          %v1419 = vsub.f32 %v1379, %v1409
          %v1420 = vsub.f32 %v1380, %v1411
          %v1421 = vsub.f32 %v1381, %v1413
          %v1422 = vsub.f32 0.0, %v1414
          %v1423 = vsub.f32 0.0, %v1415
          %v1424 = vsub.f32 0.0, %v1416
          %v1425 = vsub.f32 0.0, %v1417
          %v1426 = vsub.f32 0.0, %v1418
          %v1427 = vsub.f32 0.0, %v1419
          %v1428 = vsub.f32 0.0, %v1420
          %v1429 = vsub.f32 0.0, %v1421
          %v1430 = vsel %vm1326, %v1422, 0.0
          %v1431 = vsel %vm1327, %v1423, 0.0
          %v1432 = vsel %vm1328, %v1424, 0.0
          %v1433 = vsel %vm1329, %v1425, 0.0
          %v1434 = vsel %vm1330, %v1426, 0.0
          %v1435 = vsel %vm1331, %v1427, 0.0
          %v1436 = vsel %vm1332, %v1428, 0.0
          %v1437 = vsel %vm1333, %v1429, 0.0
          %1439 = vset.pattern.permute.xlu0 0
          %1440 = vperm.xlu0 %1439, %v1430
          %v1441 = vpop.permute.xlu0 %1440
          %1444 = vset.pattern.permute.xlu0 0
          %1445 = vperm.xlu0 %1444, %v1431
          %v1446 = vpop.permute.xlu0 %1445
          %1449 = vset.pattern.permute.xlu0 0
          %1450 = vperm.xlu0 %1449, %v1432
          %v1451 = vpop.permute.xlu0 %1450
          %1454 = vset.pattern.permute.xlu0 0
          %1455 = vperm.xlu0 %1454, %v1433
          %v1456 = vpop.permute.xlu0 %1455
          %1459 = vset.pattern.permute.xlu0 0
          %1460 = vperm.xlu0 %1459, %v1434
          %v1461 = vpop.permute.xlu0 %1460
          %1464 = vset.pattern.permute.xlu0 0
          %1465 = vperm.xlu0 %1464, %v1435
          %v1466 = vpop.permute.xlu0 %1465
          %1469 = vset.pattern.permute.xlu0 0
          %1470 = vperm.xlu0 %1469, %v1436
          %v1471 = vpop.permute.xlu0 %1470
          %1474 = vset.pattern.permute.xlu0 0
          %1475 = vperm.xlu0 %1474, %v1437
          %v1476 = vpop.permute.xlu0 %1475
          %1478 = vst [vmem:[%s327] sm:$0xff] %v1441
          %1479 = vst [vmem:[%s327 + $0x8] sm:$0xff] %v1446
          %1480 = vst [vmem:[%s327 + $0x10] sm:$0xff] %v1451
          %1481 = vst [vmem:[%s327 + $0x18] sm:$0xff] %v1456
          %1482 = vst [vmem:[%s327 + $0x20] sm:$0xff] %v1461
          %1483 = vst [vmem:[%s327 + $0x28] sm:$0xff] %v1466
          %1484 = vst [vmem:[%s327 + $0x30] sm:$0xff] %v1471
          %1485 = vst [vmem:[%s327 + $0x38] sm:$0xff] %v1476
        $region60: #{tpu_custom_call.1} parent=43 // pred_fallthru
          _
        %s1486 = sand.u32 %s196, 1
        %s1487 = scalar_lea.sflag [#allocation7], %s1486
        %s1488 = sand.u32 %s196, 1
        %s1489 = smul.addr %s1488, 64
        %s1490 = scalar_lea.vmem [#allocation6], %s1489
        // Predicated region
        $region61: #{tpu_custom_call.1} parent=43 // pred_check
          %p1491 = pneg %p206
        $region62: #{tpu_custom_call.1} parent=43 // pred_check_branch
          %1493 = sbr.rel (%p1491) target = $region64
        $region63: #{tpu_custom_call.1} parent=43 // pred_region
          %s1494 = smul.u32 8, %s24
          %s1496 = ssub.s32 1024, 1024
          %1497 = vsyncadd %s1487, %s1496
          %s1498 = smul.addr %s1494, 128
          %s1499 = scalar_lea.hbm %s6, %s1498
          %s1500 = sshll.u32 %s1490, 4
          %s1501 = int_to_ptr.vmem [resolvable:$true] %s1500
          %1506 = dma.vmem_to_hbm [thread:$0]  %s1501, 1024, %s1499, %s1487, 128, 128, 8
        $region64: #{tpu_custom_call.1} parent=43 // pred_fallthru
          _
      $region44: #{tpu_custom_call.1} parent=5 // pred_fallthru
        _
      %p1507 = scmp.le.s32.totalorder 2, %s15
      // Predicated region
      $region65: #{tpu_custom_call.1} parent=5 // pred_check
        %p1508 = pneg %p1507
      $region66: #{tpu_custom_call.1} parent=5 // pred_check_branch
        %1510 = sbr.rel (%p1508) target = $region68
      $region67: #{tpu_custom_call.1} parent=5 // pred_region
        %s1511 = ssub.s32 %s15, 2
        // Predicated region
        $region69: #{tpu_custom_call.1} parent=67 // pred_check
          %p1512 = pneg %p212
        $region70: #{tpu_custom_call.1} parent=67 // pred_check_branch
          %1514 = sbr.rel (%p1512) target = $region72
        $region71: #{tpu_custom_call.1} parent=67 // pred_region
          %s1515 = sand.u32 %s197, 1
          %s1516 = scalar_lea.sflag [#allocation7], %s1515
          %s1517 = sand.u32 %s197, 1
          %s1518 = smul.addr %s1517, 64
          %s1519 = scalar_lea.vmem [#allocation6], %s1518
          %1520 = dma.done %s1516, 1024
        $region72: #{tpu_custom_call.1} parent=67 // pred_fallthru
          _
      $region68: #{tpu_custom_call.1} parent=5 // pred_fallthru
        _
    $region6: #{tpu_custom_call.1} parent=1 // loop_footer
      %s19 = sadd.s32 1, %s15
    $region7: #{tpu_custom_call.1} parent=1 // loop_footer_branch
      %14 = sbr.rel target = $region3
    $region8: #{tpu_custom_call.1} parent=1 // loop_exit
      _
    %1521 = vsyncpa [#allocation7], 1
    %s1522 = scalar_lea.sflag [#allocation7], 1
    %1523 = vsyncpa %s1522, 1

</llo_original>
